<compile_context>
chip_gen: v7x
topology: tpu7x:2x2x1
jax: 0.10.0
libtpu: 0.0.40
codegen_flags: <defaults>
</compile_context>

<pallas_src>
import math
from functools import partial

import numpy as np
import jax
import jax.numpy as jnp
from jax import lax
from jax.experimental import pallas as pl
from jax.experimental.pallas import tpu as pltpu

# ----------------- synthetic BaseConfig -----------------
HIDDEN = 32          # hidden_size
HEAD_SIZE = 8        # attention_head_size
NUM_HEADS = 4        # num_attention_heads  (NUM_HEADS*HEAD_SIZE == HIDDEN)
MLP_SIZE = 64        # mlp_size
NUM_LAYERS = 2       # num_layers
NORM_EPS = 1e-5      # norm_eps
ROPE_FRACTION = 1    # rope_fraction (full head dim rotated)
ROPE_BASE = 10000.0  # rope_base
BATCH = 2
SEQ = 8
# hidden_act = "silu"; zero_attention = False (-> RotaryAttention)


# ----------------- fused Pallas kernel -----------------
def _fused_transformer_kernel(
    x_ref, cos_ref, sin_ref,
    ln1w_ref, ln1b_ref, wqkvr_ref, bqkvr_ref, wo_ref, bo_ref,
    ln2w_ref, ln2b_ref, wgu_ref, bgu_ref, wd_ref, bd_ref,
    normw_ref, normb_ref,
    o_ref, h_ref,
    *, num_heads, head_size, mlp_size, hidden, eps):
    """One (batch, layer) grid step on a VMEM-resident [S, H] token slab."""
    l = pl.program_id(1)
    n_layers = pl.num_programs(1)

    def layer_norm(t, w, b):
        mu = jnp.mean(t, axis=-1, keepdims=True)
        tc = t - mu
        var = jnp.mean(tc * tc, axis=-1, keepdims=True)
        return tc * lax.rsqrt(var + eps) * w + b

    # Initialize the resident hidden-state accumulator at the first layer.
    @pl.when(l == 0)
    def _():
        h_ref[...] = x_ref[...].astype(jnp.float32)

    h = h_ref[...]                                    # (S, H)
    cos = cos_ref[...]                                # (S, H)  per-head lane tiling
    sin = sin_ref[...]                                # (S, H)
    seq = h.shape[0]

    # Causal mask generated in-kernel (VPU compare/select, no HBM traffic).
    row = lax.broadcasted_iota(jnp.int32, (seq, seq), 0)
    col = lax.broadcasted_iota(jnp.int32, (seq, seq), 1)
    mask = jnp.where(col <= row, 0.0, -1e30).astype(jnp.float32)

    # ---------------- attention block ----------------
    ln1 = layer_norm(h, ln1w_ref[...], ln1b_ref[...])
    # One wide matmul: [q | k | v | rotate_half(q) | rotate_half(k)]
    # (softmax 1/sqrt(Dh) scale already folded into the q-blocks of the weights)
    qkvr = (jnp.dot(ln1, wqkvr_ref[...], preferred_element_type=jnp.float32)
            + bqkvr_ref[...])
    q = qkvr[:, :hidden]
    k = qkvr[:, hidden:2 * hidden]
    v = qkvr[:, 2 * hidden:3 * hidden]
    q_rot = qkvr[:, 3 * hidden:4 * hidden]
    k_rot = qkvr[:, 4 * hidden:5 * hidden]
    qr = q * cos + q_rot * sin                        # RoPE, heads packed along lanes
    kr = k * cos + k_rot * sin

    ctx = []
    for hd in range(num_heads):                       # static, small, unrolled
        lo, hi = hd * head_size, (hd + 1) * head_size
        # Contract over the last dim of both operands: no K transpose.
        s = lax.dot_general(qr[:, lo:hi], kr[:, lo:hi],
                            dimension_numbers=(((1,), (1,)), ((), ())),
                            preferred_element_type=jnp.float32) + mask     # (S, S)
        m = jnp.max(s, axis=-1, keepdims=True)
        p = jnp.exp(s - m)
        p = p * pl.reciprocal(jnp.sum(p, axis=-1, keepdims=True), approx=True)
        ctx.append(jnp.dot(p, v[:, lo:hi], preferred_element_type=jnp.float32))
    ctx = jnp.concatenate(ctx, axis=-1)               # lane-contiguous (S, H)
    # Single full-width O-projection instead of NH skinny matmuls.
    attn = (jnp.dot(ctx, wo_ref[...], preferred_element_type=jnp.float32)
            + bo_ref[...])
    h = h + attn

    # ---------------- MLP block ----------------
    ln2 = layer_norm(h, ln2w_ref[...], ln2b_ref[...])
    gu = (jnp.dot(ln2, wgu_ref[...], preferred_element_type=jnp.float32)
          + bgu_ref[...])                             # fused gate|up: (S, 2*MLP)
    act = jax.nn.silu(gu[:, :mlp_size]) * gu[:, mlp_size:]
    h = h + (jnp.dot(act, wd_ref[...], preferred_element_type=jnp.float32)
             + bd_ref[...])

    h_ref[...] = h                                    # carry to next layer step

    # Final LayerNorm + lane-dense store only at the last layer.
    @pl.when(l == n_layers - 1)
    def _():
        o_ref[...] = layer_norm(h, normw_ref[...], normb_ref[...]).astype(o_ref.dtype)


# ----------------- wrapper -----------------
def _total_bytes(*trees):
    leaves = []
    for t in trees:
        leaves += jax.tree_util.tree_leaves(t)
    return sum(int(np.prod(a.shape)) * a.dtype.itemsize for a in leaves)


def base_transformer_forward(params, hidden_states, fused=None):
    B, S, H = hidden_states.shape
    if fused is None:
        fused = pack_params(params)
    L = NUM_LAYERS
    MLP = MLP_SIZE

    # Per-layer weight BlockSpec (streamed / double-buffered along the layer axis).
    def lw(shape):
        return pl.BlockSpec((None,) + shape, lambda b, l: (l, 0, 0))

    # Scoped-VMEM limit sized to actual residency (v5e default is only 16 MiB).
    total = _total_bytes(fused, hidden_states)
    vmem_limit = int(min(48 * 1024 * 1024, max(8 * 1024 * 1024, 4 * total)))

    grid_spec = pltpu.PrefetchScalarGridSpec(
        num_scalar_prefetch=0,
        grid=(B, L),
        in_specs=[
            pl.BlockSpec((None, S, H), lambda b, l: (b, 0, 0)),      # x
            pl.BlockSpec((S, H), lambda b, l: (0, 0)),               # cos
            pl.BlockSpec((S, H), lambda b, l: (0, 0)),               # sin
            lw((1, H)),                                              # ln1_w
            lw((1, H)),                                              # ln1_b
            lw((H, 5 * H)),                                          # w_qkvr
            lw((1, 5 * H)),                                          # b_qkvr
            lw((H, H)),                                              # w_o
            lw((1, H)),                                              # b_o
            lw((1, H)),                                              # ln2_w
            lw((1, H)),                                              # ln2_b
            lw((H, 2 * MLP)),                                        # w_gu
            lw((1, 2 * MLP)),                                        # b_gu
            lw((MLP, H)),                                            # w_d
            lw((1, H)),                                              # b_d
            pl.BlockSpec((1, H), lambda b, l: (0, 0)),               # norm_w
            pl.BlockSpec((1, H), lambda b, l: (0, 0)),               # norm_b
        ],
        out_specs=pl.BlockSpec((None, S, H), lambda b, l: (b, 0, 0)),
        scratch_shapes=[pltpu.VMEM((S, H), jnp.float32)],            # resident h
    )

    out = pl.pallas_call(
        partial(_fused_transformer_kernel,
                num_heads=NUM_HEADS, head_size=HEAD_SIZE,
                mlp_size=MLP_SIZE, hidden=H, eps=NORM_EPS),
        out_shape=jax.ShapeDtypeStruct((B, S, H), hidden_states.dtype),
        grid_spec=grid_spec,
        compiler_params=pltpu.CompilerParams(
            dimension_semantics=("parallel", "arbitrary"),
            vmem_limit_bytes=vmem_limit),
    )(hidden_states, fused["cos"], fused["sin"],
      fused["ln1_w"], fused["ln1_b"], fused["w_qkvr"], fused["b_qkvr"],
      fused["w_o"], fused["b_o"],
      fused["ln2_w"], fused["ln2_b"], fused["w_gu"], fused["b_gu"],
      fused["w_d"], fused["b_d"],
      fused["norm_w"], fused["norm_b"])
    return out


# ----------------- parameter packing (trace/host side, done once) -----------------
def pack_params(params):
    """Layer-stacked, fusion-friendly weight layout consumed by the kernel."""
    cos_sd, sin_sd, r_head = params["rope"]               # (S,Dh), (S,Dh), (Dh,Dh)
    r_block = jnp.asarray(np.kron(np.eye(NUM_HEADS, dtype=np.float32),
                                  np.asarray(r_head)))    # block-diag rotate_half, (H,H)
    cos_full = jnp.tile(cos_sd, (1, NUM_HEADS))           # (S, H) — no batch tiling
    sin_full = jnp.tile(sin_sd, (1, NUM_HEADS))

    scale = 1.0 / math.sqrt(HEAD_SIZE)
    layers = params["layers"]

    def stack(name):
        return jnp.stack([lp[name] for lp in layers])

    w_qkvr, b_qkvr, w_gu, b_gu = [], [], [], []
    for lp in layers:
        wq_s = lp["wq"] * scale               # fold softmax scale into Q projection
        bq_s = lp["bq"] * scale
        w_qkvr.append(jnp.concatenate(
            [wq_s, lp["wk"], lp["wv"], wq_s @ r_block, lp["wk"] @ r_block], axis=1))
        b_qkvr.append(jnp.concatenate(
            [bq_s, lp["bk"], lp["bv"], bq_s @ r_block, lp["bk"] @ r_block], axis=1))
        w_gu.append(jnp.concatenate([lp["wg"], lp["wu"]], axis=1))
        b_gu.append(jnp.concatenate([lp["bg"], lp["bu"]], axis=1))

    return dict(
        cos=cos_full, sin=sin_full,
        ln1_w=stack("ln1_w"), ln1_b=stack("ln1_b"),
        ln2_w=stack("ln2_w"), ln2_b=stack("ln2_b"),
        w_qkvr=jnp.stack(w_qkvr), b_qkvr=jnp.stack(b_qkvr),   # (L, H, 5H), (L, 1, 5H)
        w_o=stack("wo"), b_o=stack("bo"),
        w_gu=jnp.stack(w_gu), b_gu=jnp.stack(b_gu),           # (L, H, 2*MLP), (L, 1, 2*MLP)
        w_d=stack("wd"), b_d=stack("bd"),
        norm_w=params["norm_w"], norm_b=params["norm_b"])


# ----------------- deterministic parameter init -----------------
def _dense(key, fan_in, fan_out):
    return (0.02 * jax.random.normal(key, (fan_in, fan_out), dtype=jnp.float32),
            jnp.zeros((1, fan_out), jnp.float32))


def build_rope(seq_len, head_size, rope_fraction, base):
    rope_dim = head_size // rope_fraction
    half = rope_dim // 2
    inv_freq = 1.0 / (base ** (np.arange(half, dtype=np.float64) * 2.0 / rope_dim))
    freqs = np.outer(np.arange(seq_len, dtype=np.float64), inv_freq)      # (S, half)
    emb = np.concatenate([freqs, freqs], axis=-1)                          # (S, rope_dim)
    cos = np.ones((seq_len, head_size), np.float32)
    sin = np.zeros((seq_len, head_size), np.float32)
    cos[:, :rope_dim] = np.cos(emb)
    sin[:, :rope_dim] = np.sin(emb)
    # rotate_half(x) == x @ R
    R = np.zeros((head_size, head_size), np.float32)
    for j in range(half):
        R[j + half, j] = -1.0
    for j in range(half, rope_dim):
        R[j - half, j] = 1.0
    return jnp.asarray(cos), jnp.asarray(sin), jnp.asarray(R)


def init_params(key):
    layers = []
    for _ in range(NUM_LAYERS):
        key, *ks = jax.random.split(key, 8)
        wq, bq = _dense(ks[0], HIDDEN, NUM_HEADS * HEAD_SIZE)
        wk, bk = _dense(ks[1], HIDDEN, NUM_HEADS * HEAD_SIZE)
        wv, bv = _dense(ks[2], HIDDEN, NUM_HEADS * HEAD_SIZE)
        wo, bo = _dense(ks[3], NUM_HEADS * HEAD_SIZE, HIDDEN)
        wg, bg = _dense(ks[4], HIDDEN, MLP_SIZE)
        wu, bu = _dense(ks[5], HIDDEN, MLP_SIZE)
        wd, bd = _dense(ks[6], MLP_SIZE, HIDDEN)
        layers.append(dict(
            ln1_w=jnp.ones((1, HIDDEN), jnp.float32), ln1_b=jnp.zeros((1, HIDDEN), jnp.float32),
            ln2_w=jnp.ones((1, HIDDEN), jnp.float32), ln2_b=jnp.zeros((1, HIDDEN), jnp.float32),
            wq=wq, bq=bq, wk=wk, bk=bk, wv=wv, bv=bv, wo=wo, bo=bo,
            wg=wg, bg=bg, wu=wu, bu=bu, wd=wd, bd=bd))
    return dict(
        layers=layers,
        norm_w=jnp.ones((1, HIDDEN), jnp.float32),
        norm_b=jnp.zeros((1, HIDDEN), jnp.float32),
        rope=build_rope(SEQ, HEAD_SIZE, ROPE_FRACTION, ROPE_BASE))


# ----------------- pure-JAX reference (for sanity check) -----------------
def reference_forward(params, x):
    cos, sin, R = params["rope"]

    def ln(t, w, b):
        mu = jnp.mean(t, -1, keepdims=True)
        var = jnp.mean((t - mu) ** 2, -1, keepdims=True)
        return (t - mu) * lax.rsqrt(var + NORM_EPS) * w + b

    def attn(t, p):
        B, S, H = t.shape
        q = t @ p["wq"] + p["bq"]
        k = t @ p["wk"] + p["bk"]
        v = t @ p["wv"] + p["bv"]
        sh = lambda u: u.reshape(B, S, NUM_HEADS, HEAD_SIZE).transpose(0, 2, 1, 3)
        q, k, v = sh(q), sh(k), sh(v)
        qr = q * cos + (q @ R) * sin
        kr = k * cos + (k @ R) * sin
        s = jnp.einsum("bhqd,bhkd->bhqk", qr, kr) / math.sqrt(HEAD_SIZE)
        mask = np.tril(np.ones((SEQ, SEQ), bool))
        s = jnp.where(mask, s, -jnp.inf)
        p_ = jax.nn.softmax(s, -1)
        o = jnp.einsum("bhqk,bhkd->bhqd", p_, v)
        o = o.transpose(0, 2, 1, 3).reshape(B, S, NUM_HEADS * HEAD_SIZE)
        return o @ p["wo"] + p["bo"]

    def mlp(t, p):
        g = t @ p["wg"] + p["bg"]
        u = t @ p["wu"] + p["bu"]
        return (jax.nn.silu(g) * u) @ p["wd"] + p["bd"]

    h = x
    for lp in params["layers"]:
        h = h + attn(ln(h, lp["ln1_w"], lp["ln1_b"]), lp)
        h = h + mlp(ln(h, lp["ln2_w"], lp["ln2_b"]), lp)
    return ln(h, params["norm_w"], params["norm_b"])


# ----------------- main -----------------
if __name__ == "__main__":
    key = jax.random.PRNGKey(0)
    kx, kp = jax.random.split(key)
    x = jax.random.normal(kx, (BATCH, SEQ, HIDDEN), dtype=jnp.float32)
    params = init_params(kp)
    fused = pack_params(params)

    out = base_transformer_forward(params, x, fused)
    out = jax.block_until_ready(out)
    assert out.shape == (BATCH, SEQ, HIDDEN)

    with jax.default_matmul_precision("highest"):
        ref = jax.block_until_ready(reference_forward(params, x))
    max_err = float(jnp.max(jnp.abs(out - ref)))
    assert max_err < 5e-3, f"mismatch vs reference: {max_err}"

    print("KERNEL_OK")
</pallas_src>

<mosaic_0001>
module attributes {stable_mosaic.version = 11 : i64} {
  func.func @_fused_transformer_kernel(%arg0: i32, %arg1: i32, %arg2: memref<1x8x32xf32, #tpu.memory_space<vmem>>, %arg3: memref<8x32xf32, #tpu.memory_space<vmem>>, %arg4: memref<8x32xf32, #tpu.memory_space<vmem>>, %arg5: memref<1x1x32xf32, #tpu.memory_space<vmem>>, %arg6: memref<1x1x32xf32, #tpu.memory_space<vmem>>, %arg7: memref<1x32x160xf32, #tpu.memory_space<vmem>>, %arg8: memref<1x1x160xf32, #tpu.memory_space<vmem>>, %arg9: memref<1x32x32xf32, #tpu.memory_space<vmem>>, %arg10: memref<1x1x32xf32, #tpu.memory_space<vmem>>, %arg11: memref<1x1x32xf32, #tpu.memory_space<vmem>>, %arg12: memref<1x1x32xf32, #tpu.memory_space<vmem>>, %arg13: memref<1x32x128xf32, #tpu.memory_space<vmem>>, %arg14: memref<1x1x128xf32, #tpu.memory_space<vmem>>, %arg15: memref<1x64x32xf32, #tpu.memory_space<vmem>>, %arg16: memref<1x1x32xf32, #tpu.memory_space<vmem>>, %arg17: memref<1x32xf32, #tpu.memory_space<vmem>>, %arg18: memref<1x32xf32, #tpu.memory_space<vmem>>, %arg19: memref<1x8x32xf32, #tpu.memory_space<vmem>>, %arg20: memref<8x32xf32, #tpu.memory_space<vmem>>) attributes {dimension_semantics = [#tpu.dimension_semantics<parallel>, #tpu.dimension_semantics<arbitrary>], iteration_bounds = array<i64: 2, 2>, scalar_prefetch = 0 : i64, scratch_operands = 1 : i64, tpu.core_type = #tpu.core_type<tc>, window_params = [{transform_indices = @transform_0, window_bounds = array<i64: 1, 8, 32>}, {pipeline_mode = #tpu.pipeline_mode<synchronous>, transform_indices = @transform_1, window_bounds = array<i64: 8, 32>}, {pipeline_mode = #tpu.pipeline_mode<synchronous>, transform_indices = @transform_2, window_bounds = array<i64: 8, 32>}, {transform_indices = @transform_3, window_bounds = array<i64: 1, 1, 32>}, {transform_indices = @transform_4, window_bounds = array<i64: 1, 1, 32>}, {transform_indices = @transform_5, window_bounds = array<i64: 1, 32, 160>}, {transform_indices = @transform_6, window_bounds = array<i64: 1, 1, 160>}, {transform_indices = @transform_7, window_bounds = array<i64: 1, 32, 32>}, {transform_indices = @transform_8, window_bounds = array<i64: 1, 1, 32>}, {transform_indices = @transform_9, window_bounds = array<i64: 1, 1, 32>}, {transform_indices = @transform_10, window_bounds = array<i64: 1, 1, 32>}, {transform_indices = @transform_11, window_bounds = array<i64: 1, 32, 128>}, {transform_indices = @transform_12, window_bounds = array<i64: 1, 1, 128>}, {transform_indices = @transform_13, window_bounds = array<i64: 1, 64, 32>}, {transform_indices = @transform_14, window_bounds = array<i64: 1, 1, 32>}, {pipeline_mode = #tpu.pipeline_mode<synchronous>, transform_indices = @transform_15, window_bounds = array<i64: 1, 32>}, {pipeline_mode = #tpu.pipeline_mode<synchronous>, transform_indices = @transform_16, window_bounds = array<i64: 1, 32>}, {transform_indices = @transform_17, window_bounds = array<i64: 1, 8, 32>}]} {
    %c0_i32 = arith.constant 0 : i32
    %0 = arith.cmpi eq, %arg1, %c0_i32 : i32
    %1 = arith.extui %0 : i1 to i32
    %c0_i32_0 = arith.constant 0 : i32
    %2 = arith.cmpi ne, %1, %c0_i32_0 : i32
    scf.if %2 {
      %c0_77 = arith.constant 0 : index
      %c0_78 = arith.constant 0 : index
      %c0_79 = arith.constant 0 : index
      %179 = vector.load %arg2[%c0_77, %c0_78, %c0_79] : memref<1x8x32xf32, #tpu.memory_space<vmem>>, vector<1x8x32xf32>
      %180 = vector.shape_cast %179 : vector<1x8x32xf32> to vector<8x32xf32>
      %c0_80 = arith.constant 0 : index
      %c0_81 = arith.constant 0 : index
      %181 = vector.load %arg20[%c0_80, %c0_81] : memref<8x32xf32, #tpu.memory_space<vmem>>, vector<8x32xf32>
      tpu.vector_store %arg20[%c0_80, %c0_81], %180 {strides = array<i32>} : memref<8x32xf32, #tpu.memory_space<vmem>>, vector<8x32xf32>,
    } else {
    }
    %c0 = arith.constant 0 : index
    %c0_1 = arith.constant 0 : index
    %3 = vector.load %arg20[%c0, %c0_1] : memref<8x32xf32, #tpu.memory_space<vmem>>, vector<8x32xf32>
    %c0_2 = arith.constant 0 : index
    %c0_3 = arith.constant 0 : index
    %4 = vector.load %arg3[%c0_2, %c0_3] : memref<8x32xf32, #tpu.memory_space<vmem>>, vector<8x32xf32>
    %c0_4 = arith.constant 0 : index
    %c0_5 = arith.constant 0 : index
    %5 = vector.load %arg4[%c0_4, %c0_5] : memref<8x32xf32, #tpu.memory_space<vmem>>, vector<8x32xf32>
    %6 = tpu.iota {dimensions = array<i32: 0>} : vector<8x8xi32>
    %7 = tpu.iota {dimensions = array<i32: 1>} : vector<8x8xi32>
    %8 = arith.cmpi sle, %7, %6 : vector<8x8xi32>
    %cst = arith.constant 0.000000e+00 : f32
    %cst_6 = arith.constant -1.000000e+30 : f32
    %9 = vector.broadcast %cst : f32 to vector<8x8xf32>
    %10 = vector.broadcast %cst_6 : f32 to vector<8x8xf32>
    %11 = arith.select %8, %9, %10 : vector<8x8xi1>, vector<8x8xf32>
    %c0_7 = arith.constant 0 : index
    %c0_8 = arith.constant 0 : index
    %c0_9 = arith.constant 0 : index
    %12 = vector.load %arg5[%c0_7, %c0_8, %c0_9] : memref<1x1x32xf32, #tpu.memory_space<vmem>>, vector<1x1x32xf32>
    %13 = vector.shape_cast %12 : vector<1x1x32xf32> to vector<1x32xf32>
    %c0_10 = arith.constant 0 : index
    %c0_11 = arith.constant 0 : index
    %c0_12 = arith.constant 0 : index
    %14 = vector.load %arg6[%c0_10, %c0_11, %c0_12] : memref<1x1x32xf32, #tpu.memory_space<vmem>>, vector<1x1x32xf32>
    %15 = vector.shape_cast %14 : vector<1x1x32xf32> to vector<1x32xf32>
    %cst_13 = arith.constant dense<0.000000e+00> : vector<8xf32>
    %16 = vector.multi_reduction <add>, %3, %cst_13 [1] : vector<8x32xf32> to vector<8xf32>
    %17 = vector.shape_cast %16 : vector<8xf32> to vector<8x1xf32>
    %cst_14 = arith.constant 3.200000e+01 : f32
    %18 = vector.broadcast %cst_14 : f32 to vector<8x1xf32>
    %19 = arith.divf %17, %18 : vector<8x1xf32>
    %20 = vector.broadcast %19 : vector<8x1xf32> to vector<8x32xf32>
    %21 = arith.subf %3, %20 : vector<8x32xf32>
    %22 = arith.mulf %21, %21 : vector<8x32xf32>
    %cst_15 = arith.constant dense<0.000000e+00> : vector<8xf32>
    %23 = vector.multi_reduction <add>, %22, %cst_15 [1] : vector<8x32xf32> to vector<8xf32>
    %24 = vector.shape_cast %23 : vector<8xf32> to vector<8x1xf32>
    %cst_16 = arith.constant 3.200000e+01 : f32
    %25 = vector.broadcast %cst_16 : f32 to vector<8x1xf32>
    %26 = arith.divf %24, %25 : vector<8x1xf32>
    %cst_17 = arith.constant 9.99999974E-6 : f32
    %27 = vector.broadcast %cst_17 : f32 to vector<8x1xf32>
    %28 = arith.addf %26, %27 : vector<8x1xf32>
    %29 = math.rsqrt %28 : vector<8x1xf32>
    %30 = vector.broadcast %29 : vector<8x1xf32> to vector<8x32xf32>
    %31 = arith.mulf %21, %30 : vector<8x32xf32>
    %32 = vector.broadcast %13 : vector<1x32xf32> to vector<8x32xf32>
    %33 = arith.mulf %31, %32 : vector<8x32xf32>
    %34 = vector.broadcast %15 : vector<1x32xf32> to vector<8x32xf32>
    %35 = arith.addf %33, %34 : vector<8x32xf32>
    %c0_18 = arith.constant 0 : index
    %c0_19 = arith.constant 0 : index
    %c0_20 = arith.constant 0 : index
    %36 = vector.load %arg7[%c0_18, %c0_19, %c0_20] : memref<1x32x160xf32, #tpu.memory_space<vmem>>, vector<1x32x160xf32>
    %37 = vector.shape_cast %36 : vector<1x32x160xf32> to vector<32x160xf32>
    %cst_21 = arith.constant dense<0.000000e+00> : vector<8x160xf32>
    %38 = tpu.matmul %35, %37, %cst_21 {dimension_numbers = #tpu.dot_dimension_numbers<[1], [0], [0], [1], [0, 0, 1, 1], [], []>} : vector<8x32xf32>, vector<32x160xf32>, vector<8x160xf32> -> vector<8x160xf32>
    %c0_22 = arith.constant 0 : index
    %c0_23 = arith.constant 0 : index
    %c0_24 = arith.constant 0 : index
    %39 = vector.load %arg8[%c0_22, %c0_23, %c0_24] : memref<1x1x160xf32, #tpu.memory_space<vmem>>, vector<1x1x160xf32>
    %40 = vector.shape_cast %39 : vector<1x1x160xf32> to vector<1x160xf32>
    %41 = vector.broadcast %40 : vector<1x160xf32> to vector<8x160xf32>
    %42 = arith.addf %38, %41 : vector<8x160xf32>
    %43 = vector.extract_strided_slice %42 {offsets = [0, 0], sizes = [8, 32], strides = [1, 1]} : vector<8x160xf32> to vector<8x32xf32>
    %44 = vector.extract_strided_slice %42 {offsets = [0, 32], sizes = [8, 32], strides = [1, 1]} : vector<8x160xf32> to vector<8x32xf32>
    %45 = vector.extract_strided_slice %42 {offsets = [0, 64], sizes = [8, 32], strides = [1, 1]} : vector<8x160xf32> to vector<8x32xf32>
    %46 = vector.extract_strided_slice %42 {offsets = [0, 96], sizes = [8, 32], strides = [1, 1]} : vector<8x160xf32> to vector<8x32xf32>
    %47 = vector.extract_strided_slice %42 {offsets = [0, 128], sizes = [8, 32], strides = [1, 1]} : vector<8x160xf32> to vector<8x32xf32>
    %48 = arith.mulf %43, %4 : vector<8x32xf32>
    %49 = arith.mulf %46, %5 : vector<8x32xf32>
    %50 = arith.addf %48, %49 : vector<8x32xf32>
    %51 = arith.mulf %44, %4 : vector<8x32xf32>
    %52 = arith.mulf %47, %5 : vector<8x32xf32>
    %53 = arith.addf %51, %52 : vector<8x32xf32>
    %54 = vector.extract_strided_slice %50 {offsets = [0, 0], sizes = [8, 8], strides = [1, 1]} : vector<8x32xf32> to vector<8x8xf32>
    %55 = vector.extract_strided_slice %53 {offsets = [0, 0], sizes = [8, 8], strides = [1, 1]} : vector<8x32xf32> to vector<8x8xf32>
    %cst_25 = arith.constant dense<0.000000e+00> : vector<8x8xf32>
    %56 = tpu.matmul %54, %55, %cst_25 {dimension_numbers = #tpu.dot_dimension_numbers<[1], [1], [0], [0], [0, 0, 1, 0], [], []>} : vector<8x8xf32>, vector<8x8xf32>, vector<8x8xf32> -> vector<8x8xf32>
    %57 = arith.addf %56, %11 : vector<8x8xf32>
    %cst_26 = arith.constant dense<0xFF800000> : vector<8xf32>
    %58 = vector.multi_reduction <maximumf>, %57, %cst_26 [1] : vector<8x8xf32> to vector<8xf32>
    %59 = vector.shape_cast %58 : vector<8xf32> to vector<8x1xf32>
    %60 = vector.broadcast %59 : vector<8x1xf32> to vector<8x8xf32>
    %61 = arith.subf %57, %60 : vector<8x8xf32>
    %62 = math.exp %61 : vector<8x8xf32>
    %cst_27 = arith.constant dense<0.000000e+00> : vector<8xf32>
    %63 = vector.multi_reduction <add>, %62, %cst_27 [1] : vector<8x8xf32> to vector<8xf32>
    %64 = vector.shape_cast %63 : vector<8xf32> to vector<8x1xf32>
    %65 = tpu.reciprocal %64 {approx = true} : vector<8x1xf32> -> vector<8x1xf32>
    %66 = vector.broadcast %65 : vector<8x1xf32> to vector<8x8xf32>
    %67 = arith.mulf %62, %66 : vector<8x8xf32>
    %68 = vector.extract_strided_slice %45 {offsets = [0, 0], sizes = [8, 8], strides = [1, 1]} : vector<8x32xf32> to vector<8x8xf32>
    %cst_28 = arith.constant dense<0.000000e+00> : vector<8x8xf32>
    %69 = tpu.matmul %67, %68, %cst_28 {dimension_numbers = #tpu.dot_dimension_numbers<[1], [0], [0], [1], [0, 0, 1, 1], [], []>} : vector<8x8xf32>, vector<8x8xf32>, vector<8x8xf32> -> vector<8x8xf32>
    %70 = vector.extract_strided_slice %50 {offsets = [0, 8], sizes = [8, 8], strides = [1, 1]} : vector<8x32xf32> to vector<8x8xf32>
    %71 = vector.extract_strided_slice %53 {offsets = [0, 8], sizes = [8, 8], strides = [1, 1]} : vector<8x32xf32> to vector<8x8xf32>
    %cst_29 = arith.constant dense<0.000000e+00> : vector<8x8xf32>
    %72 = tpu.matmul %70, %71, %cst_29 {dimension_numbers = #tpu.dot_dimension_numbers<[1], [1], [0], [0], [0, 0, 1, 0], [], []>} : vector<8x8xf32>, vector<8x8xf32>, vector<8x8xf32> -> vector<8x8xf32>
    %73 = arith.addf %72, %11 : vector<8x8xf32>
    %cst_30 = arith.constant dense<0xFF800000> : vector<8xf32>
    %74 = vector.multi_reduction <maximumf>, %73, %cst_30 [1] : vector<8x8xf32> to vector<8xf32>
    %75 = vector.shape_cast %74 : vector<8xf32> to vector<8x1xf32>
    %76 = vector.broadcast %75 : vector<8x1xf32> to vector<8x8xf32>
    %77 = arith.subf %73, %76 : vector<8x8xf32>
    %78 = math.exp %77 : vector<8x8xf32>
    %cst_31 = arith.constant dense<0.000000e+00> : vector<8xf32>
    %79 = vector.multi_reduction <add>, %78, %cst_31 [1] : vector<8x8xf32> to vector<8xf32>
    %80 = vector.shape_cast %79 : vector<8xf32> to vector<8x1xf32>
    %81 = tpu.reciprocal %80 {approx = true} : vector<8x1xf32> -> vector<8x1xf32>
    %82 = vector.broadcast %81 : vector<8x1xf32> to vector<8x8xf32>
    %83 = arith.mulf %78, %82 : vector<8x8xf32>
    %84 = vector.extract_strided_slice %45 {offsets = [0, 8], sizes = [8, 8], strides = [1, 1]} : vector<8x32xf32> to vector<8x8xf32>
    %cst_32 = arith.constant dense<0.000000e+00> : vector<8x8xf32>
    %85 = tpu.matmul %83, %84, %cst_32 {dimension_numbers = #tpu.dot_dimension_numbers<[1], [0], [0], [1], [0, 0, 1, 1], [], []>} : vector<8x8xf32>, vector<8x8xf32>, vector<8x8xf32> -> vector<8x8xf32>
    %86 = vector.extract_strided_slice %50 {offsets = [0, 16], sizes = [8, 8], strides = [1, 1]} : vector<8x32xf32> to vector<8x8xf32>
    %87 = vector.extract_strided_slice %53 {offsets = [0, 16], sizes = [8, 8], strides = [1, 1]} : vector<8x32xf32> to vector<8x8xf32>
    %cst_33 = arith.constant dense<0.000000e+00> : vector<8x8xf32>
    %88 = tpu.matmul %86, %87, %cst_33 {dimension_numbers = #tpu.dot_dimension_numbers<[1], [1], [0], [0], [0, 0, 1, 0], [], []>} : vector<8x8xf32>, vector<8x8xf32>, vector<8x8xf32> -> vector<8x8xf32>
    %89 = arith.addf %88, %11 : vector<8x8xf32>
    %cst_34 = arith.constant dense<0xFF800000> : vector<8xf32>
    %90 = vector.multi_reduction <maximumf>, %89, %cst_34 [1] : vector<8x8xf32> to vector<8xf32>
    %91 = vector.shape_cast %90 : vector<8xf32> to vector<8x1xf32>
    %92 = vector.broadcast %91 : vector<8x1xf32> to vector<8x8xf32>
    %93 = arith.subf %89, %92 : vector<8x8xf32>
    %94 = math.exp %93 : vector<8x8xf32>
    %cst_35 = arith.constant dense<0.000000e+00> : vector<8xf32>
    %95 = vector.multi_reduction <add>, %94, %cst_35 [1] : vector<8x8xf32> to vector<8xf32>
    %96 = vector.shape_cast %95 : vector<8xf32> to vector<8x1xf32>
    %97 = tpu.reciprocal %96 {approx = true} : vector<8x1xf32> -> vector<8x1xf32>
    %98 = vector.broadcast %97 : vector<8x1xf32> to vector<8x8xf32>
    %99 = arith.mulf %94, %98 : vector<8x8xf32>
    %100 = vector.extract_strided_slice %45 {offsets = [0, 16], sizes = [8, 8], strides = [1, 1]} : vector<8x32xf32> to vector<8x8xf32>
    %cst_36 = arith.constant dense<0.000000e+00> : vector<8x8xf32>
    %101 = tpu.matmul %99, %100, %cst_36 {dimension_numbers = #tpu.dot_dimension_numbers<[1], [0], [0], [1], [0, 0, 1, 1], [], []>} : vector<8x8xf32>, vector<8x8xf32>, vector<8x8xf32> -> vector<8x8xf32>
    %102 = vector.extract_strided_slice %50 {offsets = [0, 24], sizes = [8, 8], strides = [1, 1]} : vector<8x32xf32> to vector<8x8xf32>
    %103 = vector.extract_strided_slice %53 {offsets = [0, 24], sizes = [8, 8], strides = [1, 1]} : vector<8x32xf32> to vector<8x8xf32>
    %cst_37 = arith.constant dense<0.000000e+00> : vector<8x8xf32>
    %104 = tpu.matmul %102, %103, %cst_37 {dimension_numbers = #tpu.dot_dimension_numbers<[1], [1], [0], [0], [0, 0, 1, 0], [], []>} : vector<8x8xf32>, vector<8x8xf32>, vector<8x8xf32> -> vector<8x8xf32>
    %105 = arith.addf %104, %11 : vector<8x8xf32>
    %cst_38 = arith.constant dense<0xFF800000> : vector<8xf32>
    %106 = vector.multi_reduction <maximumf>, %105, %cst_38 [1] : vector<8x8xf32> to vector<8xf32>
    %107 = vector.shape_cast %106 : vector<8xf32> to vector<8x1xf32>
    %108 = vector.broadcast %107 : vector<8x1xf32> to vector<8x8xf32>
    %109 = arith.subf %105, %108 : vector<8x8xf32>
    %110 = math.exp %109 : vector<8x8xf32>
    %cst_39 = arith.constant dense<0.000000e+00> : vector<8xf32>
    %111 = vector.multi_reduction <add>, %110, %cst_39 [1] : vector<8x8xf32> to vector<8xf32>
    %112 = vector.shape_cast %111 : vector<8xf32> to vector<8x1xf32>
    %113 = tpu.reciprocal %112 {approx = true} : vector<8x1xf32> -> vector<8x1xf32>
    %114 = vector.broadcast %113 : vector<8x1xf32> to vector<8x8xf32>
    %115 = arith.mulf %110, %114 : vector<8x8xf32>
    %116 = vector.extract_strided_slice %45 {offsets = [0, 24], sizes = [8, 8], strides = [1, 1]} : vector<8x32xf32> to vector<8x8xf32>
    %cst_40 = arith.constant dense<0.000000e+00> : vector<8x8xf32>
    %117 = tpu.matmul %115, %116, %cst_40 {dimension_numbers = #tpu.dot_dimension_numbers<[1], [0], [0], [1], [0, 0, 1, 1], [], []>} : vector<8x8xf32>, vector<8x8xf32>, vector<8x8xf32> -> vector<8x8xf32>
    %118 = tpu.concatenate %69, %85, %101, %117 in 1 : vector<8x8xf32>, vector<8x8xf32>, vector<8x8xf32>, vector<8x8xf32> -> vector<8x32xf32>
    %c0_41 = arith.constant 0 : index
    %c0_42 = arith.constant 0 : index
    %c0_43 = arith.constant 0 : index
    %119 = vector.load %arg9[%c0_41, %c0_42, %c0_43] : memref<1x32x32xf32, #tpu.memory_space<vmem>>, vector<1x32x32xf32>
    %120 = vector.shape_cast %119 : vector<1x32x32xf32> to vector<32x32xf32>
    %cst_44 = arith.constant dense<0.000000e+00> : vector<8x32xf32>
    %121 = tpu.matmul %118, %120, %cst_44 {dimension_numbers = #tpu.dot_dimension_numbers<[1], [0], [0], [1], [0, 0, 1, 1], [], []>} : vector<8x32xf32>, vector<32x32xf32>, vector<8x32xf32> -> vector<8x32xf32>
    %c0_45 = arith.constant 0 : index
    %c0_46 = arith.constant 0 : index
    %c0_47 = arith.constant 0 : index
    %122 = vector.load %arg10[%c0_45, %c0_46, %c0_47] : memref<1x1x32xf32, #tpu.memory_space<vmem>>, vector<1x1x32xf32>
    %123 = vector.shape_cast %122 : vector<1x1x32xf32> to vector<1x32xf32>
    %124 = vector.broadcast %123 : vector<1x32xf32> to vector<8x32xf32>
    %125 = arith.addf %121, %124 : vector<8x32xf32>
    %126 = arith.addf %3, %125 : vector<8x32xf32>
    %c0_48 = arith.constant 0 : index
    %c0_49 = arith.constant 0 : index
    %c0_50 = arith.constant 0 : index
    %127 = vector.load %arg11[%c0_48, %c0_49, %c0_50] : memref<1x1x32xf32, #tpu.memory_space<vmem>>, vector<1x1x32xf32>
    %128 = vector.shape_cast %127 : vector<1x1x32xf32> to vector<1x32xf32>
    %c0_51 = arith.constant 0 : index
    %c0_52 = arith.constant 0 : index
    %c0_53 = arith.constant 0 : index
    %129 = vector.load %arg12[%c0_51, %c0_52, %c0_53] : memref<1x1x32xf32, #tpu.memory_space<vmem>>, vector<1x1x32xf32>
    %130 = vector.shape_cast %129 : vector<1x1x32xf32> to vector<1x32xf32>
    %cst_54 = arith.constant dense<0.000000e+00> : vector<8xf32>
    %131 = vector.multi_reduction <add>, %126, %cst_54 [1] : vector<8x32xf32> to vector<8xf32>
    %132 = vector.shape_cast %131 : vector<8xf32> to vector<8x1xf32>
    %cst_55 = arith.constant 3.200000e+01 : f32
    %133 = vector.broadcast %cst_55 : f32 to vector<8x1xf32>
    %134 = arith.divf %132, %133 : vector<8x1xf32>
    %135 = vector.broadcast %134 : vector<8x1xf32> to vector<8x32xf32>
    %136 = arith.subf %126, %135 : vector<8x32xf32>
    %137 = arith.mulf %136, %136 : vector<8x32xf32>
    %cst_56 = arith.constant dense<0.000000e+00> : vector<8xf32>
    %138 = vector.multi_reduction <add>, %137, %cst_56 [1] : vector<8x32xf32> to vector<8xf32>
    %139 = vector.shape_cast %138 : vector<8xf32> to vector<8x1xf32>
    %cst_57 = arith.constant 3.200000e+01 : f32
    %140 = vector.broadcast %cst_57 : f32 to vector<8x1xf32>
    %141 = arith.divf %139, %140 : vector<8x1xf32>
    %cst_58 = arith.constant 9.99999974E-6 : f32
    %142 = vector.broadcast %cst_58 : f32 to vector<8x1xf32>
    %143 = arith.addf %141, %142 : vector<8x1xf32>
    %144 = math.rsqrt %143 : vector<8x1xf32>
    %145 = vector.broadcast %144 : vector<8x1xf32> to vector<8x32xf32>
    %146 = arith.mulf %136, %145 : vector<8x32xf32>
    %147 = vector.broadcast %128 : vector<1x32xf32> to vector<8x32xf32>
    %148 = arith.mulf %146, %147 : vector<8x32xf32>
    %149 = vector.broadcast %130 : vector<1x32xf32> to vector<8x32xf32>
    %150 = arith.addf %148, %149 : vector<8x32xf32>
    %c0_59 = arith.constant 0 : index
    %c0_60 = arith.constant 0 : index
    %c0_61 = arith.constant 0 : index
    %151 = vector.load %arg13[%c0_59, %c0_60, %c0_61] : memref<1x32x128xf32, #tpu.memory_space<vmem>>, vector<1x32x128xf32>
    %152 = vector.shape_cast %151 : vector<1x32x128xf32> to vector<32x128xf32>
    %cst_62 = arith.constant dense<0.000000e+00> : vector<8x128xf32>
    %153 = tpu.matmul %150, %152, %cst_62 {dimension_numbers = #tpu.dot_dimension_numbers<[1], [0], [0], [1], [0, 0, 1, 1], [], []>} : vector<8x32xf32>, vector<32x128xf32>, vector<8x128xf32> -> vector<8x128xf32>
    %c0_63 = arith.constant 0 : index
    %c0_64 = arith.constant 0 : index
    %c0_65 = arith.constant 0 : index
    %154 = vector.load %arg14[%c0_63, %c0_64, %c0_65] : memref<1x1x128xf32, #tpu.memory_space<vmem>>, vector<1x1x128xf32>
    %155 = vector.shape_cast %154 : vector<1x1x128xf32> to vector<1x128xf32>
    %156 = vector.broadcast %155 : vector<1x128xf32> to vector<8x128xf32>
    %157 = arith.addf %153, %156 : vector<8x128xf32>
    %158 = vector.extract_strided_slice %157 {offsets = [0, 0], sizes = [8, 64], strides = [1, 1]} : vector<8x128xf32> to vector<8x64xf32>
    %159 = arith.negf %158 : vector<8x64xf32>
    %160 = math.exp %159 : vector<8x64xf32>
    %cst_66 = arith.constant 1.000000e+00 : f32
    %161 = vector.broadcast %cst_66 : f32 to vector<8x64xf32>
    %162 = arith.addf %161, %160 : vector<8x64xf32>
    %163 = arith.divf %161, %162 : vector<8x64xf32>
    %164 = arith.mulf %158, %163 : vector<8x64xf32>
    %165 = vector.extract_strided_slice %157 {offsets = [0, 64], sizes = [8, 64], strides = [1, 1]} : vector<8x128xf32> to vector<8x64xf32>
    %166 = arith.mulf %164, %165 : vector<8x64xf32>
    %c0_67 = arith.constant 0 : index
    %c0_68 = arith.constant 0 : index
    %c0_69 = arith.constant 0 : index
    %167 = vector.load %arg15[%c0_67, %c0_68, %c0_69] : memref<1x64x32xf32, #tpu.memory_space<vmem>>, vector<1x64x32xf32>
    %168 = vector.shape_cast %167 : vector<1x64x32xf32> to vector<64x32xf32>
    %cst_70 = arith.constant dense<0.000000e+00> : vector<8x32xf32>
    %169 = tpu.matmul %166, %168, %cst_70 {dimension_numbers = #tpu.dot_dimension_numbers<[1], [0], [0], [1], [0, 0, 1, 1], [], []>} : vector<8x64xf32>, vector<64x32xf32>, vector<8x32xf32> -> vector<8x32xf32>
    %c0_71 = arith.constant 0 : index
    %c0_72 = arith.constant 0 : index
    %c0_73 = arith.constant 0 : index
    %170 = vector.load %arg16[%c0_71, %c0_72, %c0_73] : memref<1x1x32xf32, #tpu.memory_space<vmem>>, vector<1x1x32xf32>
    %171 = vector.shape_cast %170 : vector<1x1x32xf32> to vector<1x32xf32>
    %172 = vector.broadcast %171 : vector<1x32xf32> to vector<8x32xf32>
    %173 = arith.addf %169, %172 : vector<8x32xf32>
    %174 = arith.addf %126, %173 : vector<8x32xf32>
    %c0_74 = arith.constant 0 : index
    %c0_75 = arith.constant 0 : index
    %175 = vector.load %arg20[%c0_74, %c0_75] : memref<8x32xf32, #tpu.memory_space<vmem>>, vector<8x32xf32>
    tpu.vector_store %arg20[%c0_74, %c0_75], %174 {strides = array<i32>} : memref<8x32xf32, #tpu.memory_space<vmem>>, vector<8x32xf32>,
    %c1_i32 = arith.constant 1 : i32
    %176 = arith.cmpi eq, %arg1, %c1_i32 : i32
    %177 = arith.extui %176 : i1 to i32
    %c0_i32_76 = arith.constant 0 : i32
    %178 = arith.cmpi ne, %177, %c0_i32_76 : i32
    scf.if %178 {
      %c0_77 = arith.constant 0 : index
      %c0_78 = arith.constant 0 : index
      %179 = vector.load %arg17[%c0_77, %c0_78] : memref<1x32xf32, #tpu.memory_space<vmem>>, vector<1x32xf32>
      %c0_79 = arith.constant 0 : index
      %c0_80 = arith.constant 0 : index
      %180 = vector.load %arg18[%c0_79, %c0_80] : memref<1x32xf32, #tpu.memory_space<vmem>>, vector<1x32xf32>
      %cst_81 = arith.constant dense<0.000000e+00> : vector<8xf32>
      %181 = vector.multi_reduction <add>, %174, %cst_81 [1] : vector<8x32xf32> to vector<8xf32>
      %182 = vector.shape_cast %181 : vector<8xf32> to vector<8x1xf32>
      %cst_82 = arith.constant 3.200000e+01 : f32
      %183 = vector.broadcast %cst_82 : f32 to vector<8x1xf32>
      %184 = arith.divf %182, %183 : vector<8x1xf32>
      %185 = vector.broadcast %184 : vector<8x1xf32> to vector<8x32xf32>
      %186 = arith.subf %174, %185 : vector<8x32xf32>
      %187 = arith.mulf %186, %186 : vector<8x32xf32>
      %cst_83 = arith.constant dense<0.000000e+00> : vector<8xf32>
      %188 = vector.multi_reduction <add>, %187, %cst_83 [1] : vector<8x32xf32> to vector<8xf32>
      %189 = vector.shape_cast %188 : vector<8xf32> to vector<8x1xf32>
      %cst_84 = arith.constant 3.200000e+01 : f32
      %190 = vector.broadcast %cst_84 : f32 to vector<8x1xf32>
      %191 = arith.divf %189, %190 : vector<8x1xf32>
      %cst_85 = arith.constant 9.99999974E-6 : f32
      %192 = vector.broadcast %cst_85 : f32 to vector<8x1xf32>
      %193 = arith.addf %191, %192 : vector<8x1xf32>
      %194 = math.rsqrt %193 : vector<8x1xf32>
      %195 = vector.broadcast %194 : vector<8x1xf32> to vector<8x32xf32>
      %196 = arith.mulf %186, %195 : vector<8x32xf32>
      %197 = vector.broadcast %179 : vector<1x32xf32> to vector<8x32xf32>
      %198 = arith.mulf %196, %197 : vector<8x32xf32>
      %199 = vector.broadcast %180 : vector<1x32xf32> to vector<8x32xf32>
      %200 = arith.addf %198, %199 : vector<8x32xf32>
      %c0_86 = arith.constant 0 : index
      %c0_87 = arith.constant 0 : index
      %c0_88 = arith.constant 0 : index
      %201 = vector.load %arg19[%c0_86, %c0_87, %c0_88] : memref<1x8x32xf32, #tpu.memory_space<vmem>>, vector<1x8x32xf32>
      %202 = vector.shape_cast %201 : vector<1x8x32xf32> to vector<8x32xf32>
      %203 = vector.shape_cast %200 : vector<8x32xf32> to vector<1x8x32xf32>
      tpu.vector_store %arg19[%c0_86, %c0_87, %c0_88], %203 {strides = array<i32>} : memref<1x8x32xf32, #tpu.memory_space<vmem>>, vector<1x8x32xf32>,
    } else {
    }
    return
  }
  func.func @transform_0(%arg0: i32, %arg1: i32) -> (i32, i32, i32) {
    %c0_i32 = arith.constant 0 : i32
    %c0_i32_0 = arith.constant 0 : i32
    %c0_i32_1 = arith.constant 0 : i32
    return %arg0, %c0_i32, %c0_i32_0 : i32, i32, i32
  }
  func.func @transform_1(%arg0: i32, %arg1: i32) -> (i32, i32) {
    %c0_i32 = arith.constant 0 : i32
    %c0_i32_0 = arith.constant 0 : i32
    %c0_i32_1 = arith.constant 0 : i32
    return %c0_i32, %c0_i32_0 : i32, i32
  }
  func.func @transform_2(%arg0: i32, %arg1: i32) -> (i32, i32) {
    %c0_i32 = arith.constant 0 : i32
    %c0_i32_0 = arith.constant 0 : i32
    %c0_i32_1 = arith.constant 0 : i32
    return %c0_i32, %c0_i32_0 : i32, i32
  }
  func.func @transform_3(%arg0: i32, %arg1: i32) -> (i32, i32, i32) {
    %c0_i32 = arith.constant 0 : i32
    %c0_i32_0 = arith.constant 0 : i32
    %c0_i32_1 = arith.constant 0 : i32
    return %arg1, %c0_i32, %c0_i32_0 : i32, i32, i32
  }
  func.func @transform_4(%arg0: i32, %arg1: i32) -> (i32, i32, i32) {
    %c0_i32 = arith.constant 0 : i32
    %c0_i32_0 = arith.constant 0 : i32
    %c0_i32_1 = arith.constant 0 : i32
    return %arg1, %c0_i32, %c0_i32_0 : i32, i32, i32
  }
  func.func @transform_5(%arg0: i32, %arg1: i32) -> (i32, i32, i32) {
    %c0_i32 = arith.constant 0 : i32
    %c0_i32_0 = arith.constant 0 : i32
    %c0_i32_1 = arith.constant 0 : i32
    return %arg1, %c0_i32, %c0_i32_0 : i32, i32, i32
  }
  func.func @transform_6(%arg0: i32, %arg1: i32) -> (i32, i32, i32) {
    %c0_i32 = arith.constant 0 : i32
    %c0_i32_0 = arith.constant 0 : i32
    %c0_i32_1 = arith.constant 0 : i32
    return %arg1, %c0_i32, %c0_i32_0 : i32, i32, i32
  }
  func.func @transform_7(%arg0: i32, %arg1: i32) -> (i32, i32, i32) {
    %c0_i32 = arith.constant 0 : i32
    %c0_i32_0 = arith.constant 0 : i32
    %c0_i32_1 = arith.constant 0 : i32
    return %arg1, %c0_i32, %c0_i32_0 : i32, i32, i32
  }
  func.func @transform_8(%arg0: i32, %arg1: i32) -> (i32, i32, i32) {
    %c0_i32 = arith.constant 0 : i32
    %c0_i32_0 = arith.constant 0 : i32
    %c0_i32_1 = arith.constant 0 : i32
    return %arg1, %c0_i32, %c0_i32_0 : i32, i32, i32
  }
  func.func @transform_9(%arg0: i32, %arg1: i32) -> (i32, i32, i32) {
    %c0_i32 = arith.constant 0 : i32
    %c0_i32_0 = arith.constant 0 : i32
    %c0_i32_1 = arith.constant 0 : i32
    return %arg1, %c0_i32, %c0_i32_0 : i32, i32, i32
  }
  func.func @transform_10(%arg0: i32, %arg1: i32) -> (i32, i32, i32) {
    %c0_i32 = arith.constant 0 : i32
    %c0_i32_0 = arith.constant 0 : i32
    %c0_i32_1 = arith.constant 0 : i32
    return %arg1, %c0_i32, %c0_i32_0 : i32, i32, i32
  }
  func.func @transform_11(%arg0: i32, %arg1: i32) -> (i32, i32, i32) {
    %c0_i32 = arith.constant 0 : i32
    %c0_i32_0 = arith.constant 0 : i32
    %c0_i32_1 = arith.constant 0 : i32
    return %arg1, %c0_i32, %c0_i32_0 : i32, i32, i32
  }
  func.func @transform_12(%arg0: i32, %arg1: i32) -> (i32, i32, i32) {
    %c0_i32 = arith.constant 0 : i32
    %c0_i32_0 = arith.constant 0 : i32
    %c0_i32_1 = arith.constant 0 : i32
    return %arg1, %c0_i32, %c0_i32_0 : i32, i32, i32
  }
  func.func @transform_13(%arg0: i32, %arg1: i32) -> (i32, i32, i32) {
    %c0_i32 = arith.constant 0 : i32
    %c0_i32_0 = arith.constant 0 : i32
    %c0_i32_1 = arith.constant 0 : i32
    return %arg1, %c0_i32, %c0_i32_0 : i32, i32, i32
  }
  func.func @transform_14(%arg0: i32, %arg1: i32) -> (i32, i32, i32) {
    %c0_i32 = arith.constant 0 : i32
    %c0_i32_0 = arith.constant 0 : i32
    %c0_i32_1 = arith.constant 0 : i32
    return %arg1, %c0_i32, %c0_i32_0 : i32, i32, i32
  }
  func.func @transform_15(%arg0: i32, %arg1: i32) -> (i32, i32) {
    %c0_i32 = arith.constant 0 : i32
    %c0_i32_0 = arith.constant 0 : i32
    %c0_i32_1 = arith.constant 0 : i32
    return %c0_i32, %c0_i32_0 : i32, i32
  }
  func.func @transform_16(%arg0: i32, %arg1: i32) -> (i32, i32) {
    %c0_i32 = arith.constant 0 : i32
    %c0_i32_0 = arith.constant 0 : i32
    %c0_i32_1 = arith.constant 0 : i32
    return %c0_i32, %c0_i32_0 : i32, i32
  }
  func.func @transform_17(%arg0: i32, %arg1: i32) -> (i32, i32, i32) {
    %c0_i32 = arith.constant 0 : i32
    %c0_i32_0 = arith.constant 0 : i32
    %c0_i32_1 = arith.constant 0 : i32
    return %arg0, %c0_i32, %c0_i32_0 : i32, i32, i32
  }
}

</mosaic_0001>

<llo_original>
// kernel: tpu_custom_call.1
$region0: #{tpu_custom_call.1}
  #allocation0 [shape = 'u32[]', space=smem, size = 0x4, offset = 0x4, fixed_abs, tag = 'smem constant byte address 0x4 - core index']
  #allocation1 [shape = 'u32[144,128]{1,0:T(1,128)}', space=vmem, size = 0x12000, scoped, tag = 'internal scratch']
  #allocation2 [shape = 'f32[8,32]{1,0:T(8,128)}', space=vmem, size = 0x1000, scoped, tag = 'scratch operand']
  %s0 = inlined_call_operand.vmem [shape: f32[2,8,32], index: 0, kind: input, shape index: {}]
  %s1 = inlined_call_operand.hbm [shape: f32[8,32], index: 1, kind: input, shape index: {}]
  %s2 = inlined_call_operand.hbm [shape: f32[8,32], index: 2, kind: input, shape index: {}]
  %s3 = inlined_call_operand.vmem [shape: f32[2,1,32], index: 3, kind: input, shape index: {}]
  %s4 = inlined_call_operand.hbm [shape: f32[2,1,32], index: 4, kind: input, shape index: {}]
  %s5 = inlined_call_operand.vmem [shape: f32[2,32,160], index: 5, kind: input, shape index: {}]
  %s6 = inlined_call_operand.vmem [shape: f32[2,1,160], index: 6, kind: input, shape index: {}]
  %s7 = inlined_call_operand.vmem [shape: f32[2,32,32], index: 7, kind: input, shape index: {}]
  %s8 = inlined_call_operand.vmem [shape: f32[2,1,32], index: 8, kind: input, shape index: {}]
  %s9 = inlined_call_operand.vmem [shape: f32[2,1,32], index: 9, kind: input, shape index: {}]
  %s10 = inlined_call_operand.vmem [shape: f32[2,1,32], index: 10, kind: input, shape index: {}]
  %s11 = inlined_call_operand.hbm [shape: f32[2,32,128], index: 11, kind: input, shape index: {}]
  %s12 = inlined_call_operand.vmem [shape: f32[2,1,128], index: 12, kind: input, shape index: {}]
  %s13 = inlined_call_operand.vmem [shape: f32[2,64,32], index: 13, kind: input, shape index: {}]
  %s14 = inlined_call_operand.vmem [shape: f32[2,1,32], index: 14, kind: input, shape index: {}]
  %s15 = inlined_call_operand.vmem [shape: f32[1,32], index: 15, kind: input, shape index: {}]
  %s16 = inlined_call_operand.vmem [shape: f32[1,32], index: 16, kind: input, shape index: {}]
  %s17 = inlined_call_operand.hbm [shape: f32[2,8,32], index: 17, kind: output, shape index: {}]
  %s18 = sld [smem:[#allocation0]]
  $region125: #{tpu_custom_call.1} parent=0
    _
  %s20 = ssub.s32 1, %s18
  %s21 = scalar_select 0, %s20, %s18
  $region1: #{tpu_custom_call.1} parent=0
    #allocation3 [shape = 'u8[4096]{0}', space=vmem, size = 0x1000, scoped, tag = 'input window, operand 1, single buffered']
    #allocation4 [shape = 's32[2]{0}', space=sflag, size = 0x8, scoped, tag = 'scoped memory for tpu_custom_call.1']
    #allocation5 [shape = 's32[2]{0}', space=sflag, size = 0x8, scoped, tag = 'scoped memory for tpu_custom_call.1']
    #allocation6 [shape = 'u8[4096]{0}', space=vmem, size = 0x1000, scoped, tag = 'input window, operand 2, single buffered']
    #allocation7 [shape = 's32[1]{0}', space=sflag, size = 0x4, scoped, tag = 'scoped memory for tpu_custom_call.1']
    #allocation8 [shape = 'u8[1024]{0}', space=vmem, size = 0x400, scoped, tag = 'input window, operand 4']
    #allocation9 [shape = 'u8[32768]{0}', space=vmem, size = 0x8000, scoped, tag = 'input window, operand 11']
    #allocation10 [shape = 'u8[8192]{0}', space=vmem, size = 0x2000, scoped, tag = 'output window, operand 0']
    %22 = vsyncpa [#allocation4], 0
    %23 = vsyncpa [#allocation7], 0
    %24 = vsyncpa [#allocation5], 0
    %s25 = scalar_lea.sflag [#allocation5], 1
    %26 = vsyncpa %s25, 0
    loop: start=0, step=1, limit=6
    $region2: #{tpu_custom_call.1} parent=1 // loop_pre_header
      _
    $region3: #{tpu_custom_call.1} parent=1 // loop_header
      %s28 = sphi 0, %s32
      %p29 = scmp.ge.s32.totalorder %s28, 6
      %s35 = sphi 0, %s47
      %s36 = sphi 0, %s43
      %s37 = sphi 0, %s35
      %s38 = sphi 0, %s36
      %s39 = sphi 0, %s37
      %s40 = sphi 0, %s38
      %s50 = sphi 0, %s52
      %s53 = sphi 0, %s50
      %s54 = sphi 0, %s53
      %s70 = sphi 0, %s54
      %s74 = sphi 0, %s74
      %s76 = sphi 0, %s74
      %s77 = sphi 0, %s76
      %s91 = sphi 0, %s77
      %s95 = sphi 0, %s95
      %s97 = sphi 0, %s95
      %s98 = sphi 0, %s97
      %s112 = sphi 0, %s98
      %s118 = sphi 0, %s120
      %s121 = sphi 0, %s118
      %s122 = sphi 0, %s121
      %s138 = sphi 0, %s122
      %s144 = sphi 0, %s146
      %s147 = sphi 0, %s144
      %s148 = sphi 0, %s147
      %s164 = sphi 0, %s148
      %s170 = sphi 0, %s172
      %s173 = sphi 0, %s170
      %s174 = sphi 0, %s173
      %s190 = sphi 0, %s174
      %s196 = sphi 0, %s198
      %s199 = sphi 0, %s196
      %s200 = sphi 0, %s199
      %s216 = sphi 0, %s200
      %s222 = sphi 0, %s224
      %s225 = sphi 0, %s222
      %s226 = sphi 0, %s225
      %s242 = sphi 0, %s226
      %s248 = sphi 0, %s250
      %s251 = sphi 0, %s248
      %s252 = sphi 0, %s251
      %s268 = sphi 0, %s252
      %s274 = sphi 0, %s276
      %s277 = sphi 0, %s274
      %s278 = sphi 0, %s277
      %s294 = sphi 0, %s278
      %s300 = sphi 0, %s302
      %s303 = sphi 0, %s300
      %s304 = sphi 0, %s303
      %s320 = sphi 0, %s304
      %s326 = sphi 0, %s328
      %s329 = sphi 0, %s326
      %s330 = sphi 0, %s329
      %s346 = sphi 0, %s330
      %s352 = sphi 0, %s354
      %s355 = sphi 0, %s352
      %s356 = sphi 0, %s355
      %s372 = sphi 0, %s356
      %s378 = sphi 0, %s380
      %s381 = sphi 0, %s378
      %s382 = sphi 0, %s381
      %s398 = sphi 0, %s382
      %s404 = sphi 0, %s406
      %s407 = sphi 0, %s404
      %s408 = sphi 0, %s407
      %s424 = sphi 0, %s408
      %s428 = sphi 0, %s428
      %s430 = sphi 0, %s428
      %s431 = sphi 0, %s430
      %s445 = sphi 0, %s431
      %s449 = sphi 0, %s449
      %s451 = sphi 0, %s449
      %s452 = sphi 0, %s451
      %s466 = sphi 0, %s452
      %s472 = sphi 0, %s474
      %s475 = sphi 0, %s472
      %s476 = sphi 0, %s475
      %s492 = sphi 0, %s476
    $region4: #{tpu_custom_call.1} parent=1 // loop_header_branch
      %31 = sbr.rel (%p29) target = $region8
    $region5: #{tpu_custom_call.1} parent=1 // loop_body
      %s33 = ssub.s32 %s28, 1
      %s34 = ssub.s32 %s28, 2
      %s41 = sadd.s32 1, %s36
      %p42 = scmp.ge.s32.totalorder %s41, 2
      %s43 = scalar_select %p42, 0, %s41
      %s44 = sadd.s32 1, %s35
      %s45 = scalar_select %p42, %s44, %s35
      %p46 = scmp.ge.s32.totalorder %s45, 2
      %s47 = scalar_select %p46, 0, %s45
      %s48 = ssub.s32 %s35, %s47
      %p49 = scmp.eq.s32.totalorder %s48, 0
      %s51 = sadd.s32 %s50, 1
      %s52 = scalar_select %p49, %s50, %s51
      %p55 = pneg %p49
      %p56 = scmp.eq.s32.totalorder %s28, 3
      %p57 = por %p55, %p56
      %p58 = scmp.ne.s32.totalorder %s50, %s53
      %p59 = scmp.eq.s32.totalorder %s28, 0
      %p60 = por %p58, %p59
      %p61 = scmp.ne.s32.totalorder %s50, %s53
      %p62 = scmp.eq.s32.totalorder %s33, 3
      %p63 = por %p61, %p62
      %p64 = scmp.ne.s32.totalorder %s53, %s54
      %p65 = scmp.eq.s32.totalorder %s33, 0
      %p66 = por %p64, %p65
      %p67 = scmp.ne.s32.totalorder %s53, %s54
      %p68 = scmp.eq.s32.totalorder %s34, 3
      %p69 = por %p67, %p68
      %p71 = scmp.ne.s32.totalorder %s54, %s70
      %p72 = scmp.eq.s32.totalorder %s34, 0
      %p73 = por %p71, %p72
      %s75 = sadd.s32 %s74, 1
      %p78 = scmp.eq.s32.totalorder %s28, 3
      %p79 = scmp.ne.s32.totalorder %s74, %s76
      %p80 = scmp.eq.s32.totalorder %s28, 0
      %p81 = por %p79, %p80
      %p82 = scmp.ne.s32.totalorder %s74, %s76
      %p83 = scmp.eq.s32.totalorder %s33, 3
      %p84 = por %p82, %p83
      %p85 = scmp.ne.s32.totalorder %s76, %s77
      %p86 = scmp.eq.s32.totalorder %s33, 0
      %p87 = por %p85, %p86
      %p88 = scmp.ne.s32.totalorder %s76, %s77
      %p89 = scmp.eq.s32.totalorder %s34, 3
      %p90 = por %p88, %p89
      %p92 = scmp.ne.s32.totalorder %s77, %s91
      %p93 = scmp.eq.s32.totalorder %s34, 0
      %p94 = por %p92, %p93
      %s96 = sadd.s32 %s95, 1
      %p99 = scmp.eq.s32.totalorder %s28, 3
      %p100 = scmp.ne.s32.totalorder %s95, %s97
      %p101 = scmp.eq.s32.totalorder %s28, 0
      %p102 = por %p100, %p101
      %p103 = scmp.ne.s32.totalorder %s95, %s97
      %p104 = scmp.eq.s32.totalorder %s33, 3
      %p105 = por %p103, %p104
      %p106 = scmp.ne.s32.totalorder %s97, %s98
      %p107 = scmp.eq.s32.totalorder %s33, 0
      %p108 = por %p106, %p107
      %p109 = scmp.ne.s32.totalorder %s97, %s98
      %p110 = scmp.eq.s32.totalorder %s34, 3
      %p111 = por %p109, %p110
      %p113 = scmp.ne.s32.totalorder %s98, %s112
      %p114 = scmp.eq.s32.totalorder %s34, 0
      %p115 = por %p113, %p114
      %s116 = ssub.s32 %s36, %s43
      %p117 = scmp.eq.s32.totalorder %s116, 0
      %s119 = sadd.s32 %s118, 1
      %s120 = scalar_select %p117, %s118, %s119
      %p123 = pneg %p117
      %p124 = scmp.eq.s32.totalorder %s28, 3
      %p125 = por %p123, %p124
      %p126 = scmp.ne.s32.totalorder %s118, %s121
      %p127 = scmp.eq.s32.totalorder %s28, 0
      %p128 = por %p126, %p127
      %p129 = scmp.ne.s32.totalorder %s118, %s121
      %p130 = scmp.eq.s32.totalorder %s33, 3
      %p131 = por %p129, %p130
      %p132 = scmp.ne.s32.totalorder %s121, %s122
      %p133 = scmp.eq.s32.totalorder %s33, 0
      %p134 = por %p132, %p133
      %p135 = scmp.ne.s32.totalorder %s121, %s122
      %p136 = scmp.eq.s32.totalorder %s34, 3
      %p137 = por %p135, %p136
      %p139 = scmp.ne.s32.totalorder %s122, %s138
      %p140 = scmp.eq.s32.totalorder %s34, 0
      %p141 = por %p139, %p140
      %s142 = ssub.s32 %s36, %s43
      %p143 = scmp.eq.s32.totalorder %s142, 0
      %s145 = sadd.s32 %s144, 1
      %s146 = scalar_select %p143, %s144, %s145
      %p149 = pneg %p143
      %p150 = scmp.eq.s32.totalorder %s28, 3
      %p151 = por %p149, %p150
      %p152 = scmp.ne.s32.totalorder %s144, %s147
      %p153 = scmp.eq.s32.totalorder %s28, 0
      %p154 = por %p152, %p153
      %p155 = scmp.ne.s32.totalorder %s144, %s147
      %p156 = scmp.eq.s32.totalorder %s33, 3
      %p157 = por %p155, %p156
      %p158 = scmp.ne.s32.totalorder %s147, %s148
      %p159 = scmp.eq.s32.totalorder %s33, 0
      %p160 = por %p158, %p159
      %p161 = scmp.ne.s32.totalorder %s147, %s148
      %p162 = scmp.eq.s32.totalorder %s34, 3
      %p163 = por %p161, %p162
      %p165 = scmp.ne.s32.totalorder %s148, %s164
      %p166 = scmp.eq.s32.totalorder %s34, 0
      %p167 = por %p165, %p166
      %s168 = ssub.s32 %s36, %s43
      %p169 = scmp.eq.s32.totalorder %s168, 0
      %s171 = sadd.s32 %s170, 1
      %s172 = scalar_select %p169, %s170, %s171
      %p175 = pneg %p169
      %p176 = scmp.eq.s32.totalorder %s28, 3
      %p177 = por %p175, %p176
      %p178 = scmp.ne.s32.totalorder %s170, %s173
      %p179 = scmp.eq.s32.totalorder %s28, 0
      %p180 = por %p178, %p179
      %p181 = scmp.ne.s32.totalorder %s170, %s173
      %p182 = scmp.eq.s32.totalorder %s33, 3
      %p183 = por %p181, %p182
      %p184 = scmp.ne.s32.totalorder %s173, %s174
      %p185 = scmp.eq.s32.totalorder %s33, 0
      %p186 = por %p184, %p185
      %p187 = scmp.ne.s32.totalorder %s173, %s174
      %p188 = scmp.eq.s32.totalorder %s34, 3
      %p189 = por %p187, %p188
      %p191 = scmp.ne.s32.totalorder %s174, %s190
      %p192 = scmp.eq.s32.totalorder %s34, 0
      %p193 = por %p191, %p192
      %s194 = ssub.s32 %s36, %s43
      %p195 = scmp.eq.s32.totalorder %s194, 0
      %s197 = sadd.s32 %s196, 1
      %s198 = scalar_select %p195, %s196, %s197
      %p201 = pneg %p195
      %p202 = scmp.eq.s32.totalorder %s28, 3
      %p203 = por %p201, %p202
      %p204 = scmp.ne.s32.totalorder %s196, %s199
      %p205 = scmp.eq.s32.totalorder %s28, 0
      %p206 = por %p204, %p205
      %p207 = scmp.ne.s32.totalorder %s196, %s199
      %p208 = scmp.eq.s32.totalorder %s33, 3
      %p209 = por %p207, %p208
      %p210 = scmp.ne.s32.totalorder %s199, %s200
      %p211 = scmp.eq.s32.totalorder %s33, 0
      %p212 = por %p210, %p211
      %p213 = scmp.ne.s32.totalorder %s199, %s200
      %p214 = scmp.eq.s32.totalorder %s34, 3
      %p215 = por %p213, %p214
      %p217 = scmp.ne.s32.totalorder %s200, %s216
      %p218 = scmp.eq.s32.totalorder %s34, 0
      %p219 = por %p217, %p218
      %s220 = ssub.s32 %s36, %s43
      %p221 = scmp.eq.s32.totalorder %s220, 0
      %s223 = sadd.s32 %s222, 1
      %s224 = scalar_select %p221, %s222, %s223
      %p227 = pneg %p221
      %p228 = scmp.eq.s32.totalorder %s28, 3
      %p229 = por %p227, %p228
      %p230 = scmp.ne.s32.totalorder %s222, %s225
      %p231 = scmp.eq.s32.totalorder %s28, 0
      %p232 = por %p230, %p231
      %p233 = scmp.ne.s32.totalorder %s222, %s225
      %p234 = scmp.eq.s32.totalorder %s33, 3
      %p235 = por %p233, %p234
      %p236 = scmp.ne.s32.totalorder %s225, %s226
      %p237 = scmp.eq.s32.totalorder %s33, 0
      %p238 = por %p236, %p237
      %p239 = scmp.ne.s32.totalorder %s225, %s226
      %p240 = scmp.eq.s32.totalorder %s34, 3
      %p241 = por %p239, %p240
      %p243 = scmp.ne.s32.totalorder %s226, %s242
      %p244 = scmp.eq.s32.totalorder %s34, 0
      %p245 = por %p243, %p244
      %s246 = ssub.s32 %s36, %s43
      %p247 = scmp.eq.s32.totalorder %s246, 0
      %s249 = sadd.s32 %s248, 1
      %s250 = scalar_select %p247, %s248, %s249
      %p253 = pneg %p247
      %p254 = scmp.eq.s32.totalorder %s28, 3
      %p255 = por %p253, %p254
      %p256 = scmp.ne.s32.totalorder %s248, %s251
      %p257 = scmp.eq.s32.totalorder %s28, 0
      %p258 = por %p256, %p257
      %p259 = scmp.ne.s32.totalorder %s248, %s251
      %p260 = scmp.eq.s32.totalorder %s33, 3
      %p261 = por %p259, %p260
      %p262 = scmp.ne.s32.totalorder %s251, %s252
      %p263 = scmp.eq.s32.totalorder %s33, 0
      %p264 = por %p262, %p263
      %p265 = scmp.ne.s32.totalorder %s251, %s252
      %p266 = scmp.eq.s32.totalorder %s34, 3
      %p267 = por %p265, %p266
      %p269 = scmp.ne.s32.totalorder %s252, %s268
      %p270 = scmp.eq.s32.totalorder %s34, 0
      %p271 = por %p269, %p270
      %s272 = ssub.s32 %s36, %s43
      %p273 = scmp.eq.s32.totalorder %s272, 0
      %s275 = sadd.s32 %s274, 1
      %s276 = scalar_select %p273, %s274, %s275
      %p279 = pneg %p273
      %p280 = scmp.eq.s32.totalorder %s28, 3
      %p281 = por %p279, %p280
      %p282 = scmp.ne.s32.totalorder %s274, %s277
      %p283 = scmp.eq.s32.totalorder %s28, 0
      %p284 = por %p282, %p283
      %p285 = scmp.ne.s32.totalorder %s274, %s277
      %p286 = scmp.eq.s32.totalorder %s33, 3
      %p287 = por %p285, %p286
      %p288 = scmp.ne.s32.totalorder %s277, %s278
      %p289 = scmp.eq.s32.totalorder %s33, 0
      %p290 = por %p288, %p289
      %p291 = scmp.ne.s32.totalorder %s277, %s278
      %p292 = scmp.eq.s32.totalorder %s34, 3
      %p293 = por %p291, %p292
      %p295 = scmp.ne.s32.totalorder %s278, %s294
      %p296 = scmp.eq.s32.totalorder %s34, 0
      %p297 = por %p295, %p296
      %s298 = ssub.s32 %s36, %s43
      %p299 = scmp.eq.s32.totalorder %s298, 0
      %s301 = sadd.s32 %s300, 1
      %s302 = scalar_select %p299, %s300, %s301
      %p305 = pneg %p299
      %p306 = scmp.eq.s32.totalorder %s28, 3
      %p307 = por %p305, %p306
      %p308 = scmp.ne.s32.totalorder %s300, %s303
      %p309 = scmp.eq.s32.totalorder %s28, 0
      %p310 = por %p308, %p309
      %p311 = scmp.ne.s32.totalorder %s300, %s303
      %p312 = scmp.eq.s32.totalorder %s33, 3
      %p313 = por %p311, %p312
      %p314 = scmp.ne.s32.totalorder %s303, %s304
      %p315 = scmp.eq.s32.totalorder %s33, 0
      %p316 = por %p314, %p315
      %p317 = scmp.ne.s32.totalorder %s303, %s304
      %p318 = scmp.eq.s32.totalorder %s34, 3
      %p319 = por %p317, %p318
      %p321 = scmp.ne.s32.totalorder %s304, %s320
      %p322 = scmp.eq.s32.totalorder %s34, 0
      %p323 = por %p321, %p322
      %s324 = ssub.s32 %s36, %s43
      %p325 = scmp.eq.s32.totalorder %s324, 0
      %s327 = sadd.s32 %s326, 1
      %s328 = scalar_select %p325, %s326, %s327
      %p331 = pneg %p325
      %p332 = scmp.eq.s32.totalorder %s28, 3
      %p333 = por %p331, %p332
      %p334 = scmp.ne.s32.totalorder %s326, %s329
      %p335 = scmp.eq.s32.totalorder %s28, 0
      %p336 = por %p334, %p335
      %p337 = scmp.ne.s32.totalorder %s326, %s329
      %p338 = scmp.eq.s32.totalorder %s33, 3
      %p339 = por %p337, %p338
      %p340 = scmp.ne.s32.totalorder %s329, %s330
      %p341 = scmp.eq.s32.totalorder %s33, 0
      %p342 = por %p340, %p341
      %p343 = scmp.ne.s32.totalorder %s329, %s330
      %p344 = scmp.eq.s32.totalorder %s34, 3
      %p345 = por %p343, %p344
      %p347 = scmp.ne.s32.totalorder %s330, %s346
      %p348 = scmp.eq.s32.totalorder %s34, 0
      %p349 = por %p347, %p348
      %s350 = ssub.s32 %s36, %s43
      %p351 = scmp.eq.s32.totalorder %s350, 0
      %s353 = sadd.s32 %s352, 1
      %s354 = scalar_select %p351, %s352, %s353
      %p357 = pneg %p351
      %p358 = scmp.eq.s32.totalorder %s28, 3
      %p359 = por %p357, %p358
      %p360 = scmp.ne.s32.totalorder %s352, %s355
      %p361 = scmp.eq.s32.totalorder %s28, 0
      %p362 = por %p360, %p361
      %p363 = scmp.ne.s32.totalorder %s352, %s355
      %p364 = scmp.eq.s32.totalorder %s33, 3
      %p365 = por %p363, %p364
      %p366 = scmp.ne.s32.totalorder %s355, %s356
      %p367 = scmp.eq.s32.totalorder %s33, 0
      %p368 = por %p366, %p367
      %p369 = scmp.ne.s32.totalorder %s355, %s356
      %p370 = scmp.eq.s32.totalorder %s34, 3
      %p371 = por %p369, %p370
      %p373 = scmp.ne.s32.totalorder %s356, %s372
      %p374 = scmp.eq.s32.totalorder %s34, 0
      %p375 = por %p373, %p374
      %s376 = ssub.s32 %s36, %s43
      %p377 = scmp.eq.s32.totalorder %s376, 0
      %s379 = sadd.s32 %s378, 1
      %s380 = scalar_select %p377, %s378, %s379
      %p383 = pneg %p377
      %p384 = scmp.eq.s32.totalorder %s28, 3
      %p385 = por %p383, %p384
      %p386 = scmp.ne.s32.totalorder %s378, %s381
      %p387 = scmp.eq.s32.totalorder %s28, 0
      %p388 = por %p386, %p387
      %p389 = scmp.ne.s32.totalorder %s378, %s381
      %p390 = scmp.eq.s32.totalorder %s33, 3
      %p391 = por %p389, %p390
      %p392 = scmp.ne.s32.totalorder %s381, %s382
      %p393 = scmp.eq.s32.totalorder %s33, 0
      %p394 = por %p392, %p393
      %p395 = scmp.ne.s32.totalorder %s381, %s382
      %p396 = scmp.eq.s32.totalorder %s34, 3
      %p397 = por %p395, %p396
      %p399 = scmp.ne.s32.totalorder %s382, %s398
      %p400 = scmp.eq.s32.totalorder %s34, 0
      %p401 = por %p399, %p400
      %s402 = ssub.s32 %s36, %s43
      %p403 = scmp.eq.s32.totalorder %s402, 0
      %s405 = sadd.s32 %s404, 1
      %s406 = scalar_select %p403, %s404, %s405
      %p409 = pneg %p403
      %p410 = scmp.eq.s32.totalorder %s28, 3
      %p411 = por %p409, %p410
      %p412 = scmp.ne.s32.totalorder %s404, %s407
      %p413 = scmp.eq.s32.totalorder %s28, 0
      %p414 = por %p412, %p413
      %p415 = scmp.ne.s32.totalorder %s404, %s407
      %p416 = scmp.eq.s32.totalorder %s33, 3
      %p417 = por %p415, %p416
      %p418 = scmp.ne.s32.totalorder %s407, %s408
      %p419 = scmp.eq.s32.totalorder %s33, 0
      %p420 = por %p418, %p419
      %p421 = scmp.ne.s32.totalorder %s407, %s408
      %p422 = scmp.eq.s32.totalorder %s34, 3
      %p423 = por %p421, %p422
      %p425 = scmp.ne.s32.totalorder %s408, %s424
      %p426 = scmp.eq.s32.totalorder %s34, 0
      %p427 = por %p425, %p426
      %s429 = sadd.s32 %s428, 1
      %p432 = scmp.eq.s32.totalorder %s28, 3
      %p433 = scmp.ne.s32.totalorder %s428, %s430
      %p434 = scmp.eq.s32.totalorder %s28, 0
      %p435 = por %p433, %p434
      %p436 = scmp.ne.s32.totalorder %s428, %s430
      %p437 = scmp.eq.s32.totalorder %s33, 3
      %p438 = por %p436, %p437
      %p439 = scmp.ne.s32.totalorder %s430, %s431
      %p440 = scmp.eq.s32.totalorder %s33, 0
      %p441 = por %p439, %p440
      %p442 = scmp.ne.s32.totalorder %s430, %s431
      %p443 = scmp.eq.s32.totalorder %s34, 3
      %p444 = por %p442, %p443
      %p446 = scmp.ne.s32.totalorder %s431, %s445
      %p447 = scmp.eq.s32.totalorder %s34, 0
      %p448 = por %p446, %p447
      %s450 = sadd.s32 %s449, 1
      %p453 = scmp.eq.s32.totalorder %s28, 3
      %p454 = scmp.ne.s32.totalorder %s449, %s451
      %p455 = scmp.eq.s32.totalorder %s28, 0
      %p456 = por %p454, %p455
      %p457 = scmp.ne.s32.totalorder %s449, %s451
      %p458 = scmp.eq.s32.totalorder %s33, 3
      %p459 = por %p457, %p458
      %p460 = scmp.ne.s32.totalorder %s451, %s452
      %p461 = scmp.eq.s32.totalorder %s33, 0
      %p462 = por %p460, %p461
      %p463 = scmp.ne.s32.totalorder %s451, %s452
      %p464 = scmp.eq.s32.totalorder %s34, 3
      %p465 = por %p463, %p464
      %p467 = scmp.ne.s32.totalorder %s452, %s466
      %p468 = scmp.eq.s32.totalorder %s34, 0
      %p469 = por %p467, %p468
      %s470 = ssub.s32 %s35, %s47
      %p471 = scmp.eq.s32.totalorder %s470, 0
      %s473 = sadd.s32 %s472, 1
      %s474 = scalar_select %p471, %s472, %s473
      %p477 = pneg %p471
      %p478 = scmp.eq.s32.totalorder %s28, 3
      %p479 = por %p477, %p478
      %p480 = scmp.ne.s32.totalorder %s472, %s475
      %p481 = scmp.eq.s32.totalorder %s28, 0
      %p482 = por %p480, %p481
      %p483 = scmp.ne.s32.totalorder %s472, %s475
      %p484 = scmp.eq.s32.totalorder %s33, 3
      %p485 = por %p483, %p484
      %p486 = scmp.ne.s32.totalorder %s475, %s476
      %p487 = scmp.eq.s32.totalorder %s33, 0
      %p488 = por %p486, %p487
      %p489 = scmp.ne.s32.totalorder %s475, %s476
      %p490 = scmp.eq.s32.totalorder %s34, 3
      %p491 = por %p489, %p490
      %p493 = scmp.ne.s32.totalorder %s476, %s492
      %p494 = scmp.eq.s32.totalorder %s34, 0
      %p495 = por %p493, %p494
      %p496 = scmp.le.s32.totalorder 1, %s28
      %p497 = scmp.lt.s32.totalorder %s28, 5
      %p498 = pnand %p496, %p497
      %p499 = pneg %p498
      // Predicated region
      $region9: #{tpu_custom_call.1} parent=5 // pred_check
        _
      $region10: #{tpu_custom_call.1} parent=5 // pred_check_branch
        %501 = sbr.rel (%p498) target = $region12
      $region11: #{tpu_custom_call.1} parent=5 // pred_region
        %s502 = ssub.s32 %s28, 1
        // Predicated region
        $region13: #{tpu_custom_call.1} parent=11 // pred_check
          %p503 = pneg %p87
        $region14: #{tpu_custom_call.1} parent=11 // pred_check_branch
          %505 = sbr.rel (%p503) target = $region16
        $region15: #{tpu_custom_call.1} parent=11 // pred_region
          %s507 = ssub.s32 128, 128
          %508 = vsyncadd [#allocation4], %s507
          %s510 = sshll.u32 [#allocation3], 4
          %s511 = int_to_ptr.vmem [resolvable:$true] %s510
          %513 = dma.hbm_to_vmem [thread:$0]  %s1, 128, %s511, [#allocation4]
        $region16: #{tpu_custom_call.1} parent=11 // pred_fallthru
          _
        // Predicated region
        $region17: #{tpu_custom_call.1} parent=11 // pred_check
          %p514 = pneg %p108
        $region18: #{tpu_custom_call.1} parent=11 // pred_check_branch
          %516 = sbr.rel (%p514) target = $region20
        $region19: #{tpu_custom_call.1} parent=11 // pred_region
          %s518 = ssub.s32 128, 128
          %519 = vsyncadd [#allocation7], %s518
          %s521 = sshll.u32 [#allocation6], 4
          %s522 = int_to_ptr.vmem [resolvable:$true] %s521
          %524 = dma.hbm_to_vmem [thread:$0]  %s2, 128, %s522, [#allocation7]
        $region20: #{tpu_custom_call.1} parent=11 // pred_fallthru
          _
        // Predicated region
        $region21: #{tpu_custom_call.1} parent=11 // pred_check
          %p525 = pneg %p441
        $region22: #{tpu_custom_call.1} parent=11 // pred_check_branch
          %527 = sbr.rel (%p525) target = $region24
        $region23: #{tpu_custom_call.1} parent=11 // pred_region
          _
        $region24: #{tpu_custom_call.1} parent=11 // pred_fallthru
          _
        // Predicated region
        $region25: #{tpu_custom_call.1} parent=11 // pred_check
          %p528 = pneg %p462
        $region26: #{tpu_custom_call.1} parent=11 // pred_check_branch
          %530 = sbr.rel (%p528) target = $region28
        $region27: #{tpu_custom_call.1} parent=11 // pred_region
          _
        $region28: #{tpu_custom_call.1} parent=11 // pred_fallthru
          _
      $region12: #{tpu_custom_call.1} parent=5 // pred_fallthru
        _
      %p531 = scmp.lt.s32.totalorder %s28, 4
      // Predicated region
      $region29: #{tpu_custom_call.1} parent=5 // pred_check
        %p532 = pneg %p531
      $region30: #{tpu_custom_call.1} parent=5 // pred_check_branch
        %534 = sbr.rel (%p532) target = $region32
      $region31: #{tpu_custom_call.1} parent=5 // pred_region
        // Predicated region
        $region33: #{tpu_custom_call.1} parent=31 // pred_check
          %p535 = pneg %p60
        $region34: #{tpu_custom_call.1} parent=31 // pred_check_branch
          %537 = sbr.rel (%p535) target = $region36
        $region35: #{tpu_custom_call.1} parent=31 // pred_region
          %p538 = scmp.lt.s32.totalorder %s35, 1
          %s539 = scalar_select %p538, %s35, 1
          %s540 = smul.addr %s539, 8
          %s541 = scalar_lea.vmem %s0, %s540
        $region36: #{tpu_custom_call.1} parent=31 // pred_fallthru
          _
        // Predicated region
        $region37: #{tpu_custom_call.1} parent=31 // pred_check
          %p542 = pneg %p128
        $region38: #{tpu_custom_call.1} parent=31 // pred_check_branch
          %544 = sbr.rel (%p542) target = $region40
        $region39: #{tpu_custom_call.1} parent=31 // pred_region
          %p545 = scmp.lt.s32.totalorder %s36, 1
          %s546 = scalar_select %p545, %s36, 1
          %s547 = scalar_lea.vmem %s3, %s546
        $region40: #{tpu_custom_call.1} parent=31 // pred_fallthru
          _
        // Predicated region
        $region41: #{tpu_custom_call.1} parent=31 // pred_check
          %p548 = pneg %p154
        $region42: #{tpu_custom_call.1} parent=31 // pred_check_branch
          %550 = sbr.rel (%p548) target = $region44
        $region43: #{tpu_custom_call.1} parent=31 // pred_region
          %s551 = sand.u32 %s28, 1
          %s552 = scalar_lea.sflag [#allocation4], %s551
          %s553 = sand.u32 %s144, 1
          %s554 = scalar_lea.vmem [#allocation8], %s553
          %s556 = ssub.s32 16, 16
          %557 = vsyncadd %s552, %s556
          %s558 = smul.addr %s36, 16
          %s559 = scalar_lea.hbm %s4, %s558
          %s561 = sshll.u32 %s554, 4
          %s562 = int_to_ptr.vmem [resolvable:$true] %s561
          %564 = dma.hbm_to_vmem [thread:$0]  %s559, 16, %s562, %s552
        $region44: #{tpu_custom_call.1} parent=31 // pred_fallthru
          _
        // Predicated region
        $region45: #{tpu_custom_call.1} parent=31 // pred_check
          %p565 = pneg %p180
        $region46: #{tpu_custom_call.1} parent=31 // pred_check_branch
          %567 = sbr.rel (%p565) target = $region48
        $region47: #{tpu_custom_call.1} parent=31 // pred_region
          %p568 = scmp.lt.s32.totalorder %s36, 1
          %s569 = scalar_select %p568, %s36, 1
          %s570 = smul.addr %s569, 8
          %s571 = smul.addr %s570, 8
          %s572 = scalar_lea.vmem %s5, %s571
        $region48: #{tpu_custom_call.1} parent=31 // pred_fallthru
          _
        // Predicated region
        $region49: #{tpu_custom_call.1} parent=31 // pred_check
          %p573 = pneg %p206
        $region50: #{tpu_custom_call.1} parent=31 // pred_check_branch
          %575 = sbr.rel (%p573) target = $region52
        $region51: #{tpu_custom_call.1} parent=31 // pred_region
          %p576 = scmp.lt.s32.totalorder %s36, 1
          %s577 = scalar_select %p576, %s36, 1
          %s578 = smul.addr %s577, 2
          %s579 = scalar_lea.vmem %s6, %s578
        $region52: #{tpu_custom_call.1} parent=31 // pred_fallthru
          _
        // Predicated region
        $region53: #{tpu_custom_call.1} parent=31 // pred_check
          %p580 = pneg %p232
        $region54: #{tpu_custom_call.1} parent=31 // pred_check_branch
          %582 = sbr.rel (%p580) target = $region56
        $region55: #{tpu_custom_call.1} parent=31 // pred_region
          %p583 = scmp.lt.s32.totalorder %s36, 1
          %s584 = scalar_select %p583, %s36, 1
          %s585 = smul.addr %s584, 4
          %s586 = smul.addr %s585, 8
          %s587 = scalar_lea.vmem %s7, %s586
        $region56: #{tpu_custom_call.1} parent=31 // pred_fallthru
          _
        // Predicated region
        $region57: #{tpu_custom_call.1} parent=31 // pred_check
          %p588 = pneg %p258
        $region58: #{tpu_custom_call.1} parent=31 // pred_check_branch
          %590 = sbr.rel (%p588) target = $region60
        $region59: #{tpu_custom_call.1} parent=31 // pred_region
          %p591 = scmp.lt.s32.totalorder %s36, 1
          %s592 = scalar_select %p591, %s36, 1
          %s593 = scalar_lea.vmem %s8, %s592
        $region60: #{tpu_custom_call.1} parent=31 // pred_fallthru
          _
        // Predicated region
        $region61: #{tpu_custom_call.1} parent=31 // pred_check
          %p594 = pneg %p284
        $region62: #{tpu_custom_call.1} parent=31 // pred_check_branch
          %596 = sbr.rel (%p594) target = $region64
        $region63: #{tpu_custom_call.1} parent=31 // pred_region
          %p597 = scmp.lt.s32.totalorder %s36, 1
          %s598 = scalar_select %p597, %s36, 1
          %s599 = scalar_lea.vmem %s9, %s598
        $region64: #{tpu_custom_call.1} parent=31 // pred_fallthru
          _
        // Predicated region
        $region65: #{tpu_custom_call.1} parent=31 // pred_check
          %p600 = pneg %p310
        $region66: #{tpu_custom_call.1} parent=31 // pred_check_branch
          %602 = sbr.rel (%p600) target = $region68
        $region67: #{tpu_custom_call.1} parent=31 // pred_region
          %p603 = scmp.lt.s32.totalorder %s36, 1
          %s604 = scalar_select %p603, %s36, 1
          %s605 = scalar_lea.vmem %s10, %s604
        $region68: #{tpu_custom_call.1} parent=31 // pred_fallthru
          _
        // Predicated region
        $region69: #{tpu_custom_call.1} parent=31 // pred_check
          %p606 = pneg %p336
        $region70: #{tpu_custom_call.1} parent=31 // pred_check_branch
          %608 = sbr.rel (%p606) target = $region72
        $region71: #{tpu_custom_call.1} parent=31 // pred_region
          %s609 = sand.u32 %s28, 1
          %s610 = scalar_lea.sflag [#allocation4], %s609
          %s611 = sand.u32 %s326, 1
          %s612 = smul.addr %s611, 32
          %s613 = scalar_lea.vmem [#allocation9], %s612
          %s615 = ssub.s32 512, 512
          %616 = vsyncadd %s610, %s615
          %s617 = smul.addr %s36, 4
          %s618 = smul.addr %s617, 128
          %s619 = scalar_lea.hbm %s11, %s618
          %s620 = sshll.u32 %s613, 4
          %s621 = int_to_ptr.vmem [resolvable:$true] %s620
          %626 = dma.hbm_to_vmem [thread:$0]  %s619, 512, %s621, %s610, 128, 128, 8
        $region72: #{tpu_custom_call.1} parent=31 // pred_fallthru
          _
        // Predicated region
        $region73: #{tpu_custom_call.1} parent=31 // pred_check
          %p627 = pneg %p362
        $region74: #{tpu_custom_call.1} parent=31 // pred_check_branch
          %629 = sbr.rel (%p627) target = $region76
        $region75: #{tpu_custom_call.1} parent=31 // pred_region
          %p630 = scmp.lt.s32.totalorder %s36, 1
          %s631 = scalar_select %p630, %s36, 1
          %s632 = scalar_lea.vmem %s12, %s631
        $region76: #{tpu_custom_call.1} parent=31 // pred_fallthru
          _
        // Predicated region
        $region77: #{tpu_custom_call.1} parent=31 // pred_check
          %p633 = pneg %p388
        $region78: #{tpu_custom_call.1} parent=31 // pred_check_branch
          %635 = sbr.rel (%p633) target = $region80
        $region79: #{tpu_custom_call.1} parent=31 // pred_region
          %p636 = scmp.lt.s32.totalorder %s36, 1
          %s637 = scalar_select %p636, %s36, 1
          %s638 = smul.addr %s637, 8
          %s639 = smul.addr %s638, 8
          %s640 = scalar_lea.vmem %s13, %s639
        $region80: #{tpu_custom_call.1} parent=31 // pred_fallthru
          _
        // Predicated region
        $region81: #{tpu_custom_call.1} parent=31 // pred_check
          %p641 = pneg %p414
        $region82: #{tpu_custom_call.1} parent=31 // pred_check_branch
          %643 = sbr.rel (%p641) target = $region84
        $region83: #{tpu_custom_call.1} parent=31 // pred_region
          %p644 = scmp.lt.s32.totalorder %s36, 1
          %s645 = scalar_select %p644, %s36, 1
          %s646 = scalar_lea.vmem %s14, %s645
        $region84: #{tpu_custom_call.1} parent=31 // pred_fallthru
          _
      $region32: #{tpu_custom_call.1} parent=5 // pred_fallthru
        _
      %p647 = scmp.le.s32.totalorder 1, %s28
      %p648 = scmp.lt.s32.totalorder %s28, 5
      %p649 = pnand %p647, %p648
      %p650 = pneg %p649
      // Predicated region
      $region85: #{tpu_custom_call.1} parent=5 // pred_check
        _
      $region86: #{tpu_custom_call.1} parent=5 // pred_check_branch
        %652 = sbr.rel (%p649) target = $region88
      $region87: #{tpu_custom_call.1} parent=5 // pred_region
        %s653 = ssub.s32 %s28, 1
        // Predicated region
        $region89: #{tpu_custom_call.1} parent=87 // pred_check
          %p654 = pneg %p87
        $region90: #{tpu_custom_call.1} parent=87 // pred_check_branch
          %656 = sbr.rel (%p654) target = $region92
        $region91: #{tpu_custom_call.1} parent=87 // pred_region
          %657 = dma.done [#allocation4], 128
        $region92: #{tpu_custom_call.1} parent=87 // pred_fallthru
          _
        // Predicated region
        $region93: #{tpu_custom_call.1} parent=87 // pred_check
          %p658 = pneg %p108
        $region94: #{tpu_custom_call.1} parent=87 // pred_check_branch
          %660 = sbr.rel (%p658) target = $region96
        $region95: #{tpu_custom_call.1} parent=87 // pred_region
          %661 = dma.done [#allocation7], 128
        $region96: #{tpu_custom_call.1} parent=87 // pred_fallthru
          _
        %s662 = sand.u32 %s33, 1
        %s663 = scalar_lea.sflag [#allocation4], %s662
        %s664 = sand.u32 %s147, 1
        %s665 = scalar_lea.vmem [#allocation8], %s664
        // Predicated region
        $region97: #{tpu_custom_call.1} parent=87 // pred_check
          %p666 = pneg %p160
        $region98: #{tpu_custom_call.1} parent=87 // pred_check_branch
          %668 = sbr.rel (%p666) target = $region100
        $region99: #{tpu_custom_call.1} parent=87 // pred_region
          %669 = dma.done %s663, 16
        $region100: #{tpu_custom_call.1} parent=87 // pred_fallthru
          _
        %s670 = sand.u32 %s33, 1
        %s671 = scalar_lea.sflag [#allocation4], %s670
        %s672 = sand.u32 %s329, 1
        %s673 = smul.addr %s672, 32
        %s674 = scalar_lea.vmem [#allocation9], %s673
        // Predicated region
        $region101: #{tpu_custom_call.1} parent=87 // pred_check
          %p675 = pneg %p342
        $region102: #{tpu_custom_call.1} parent=87 // pred_check_branch
          %677 = sbr.rel (%p675) target = $region104
        $region103: #{tpu_custom_call.1} parent=87 // pred_region
          %678 = dma.done %s671, 512
        $region104: #{tpu_custom_call.1} parent=87 // pred_fallthru
          _
        %p679 = scmp.lt.s32.totalorder %s37, 1
        %s680 = scalar_select %p679, %s37, 1
        %s681 = smul.addr %s680, 8
        %s682 = scalar_lea.vmem %s0, %s681
        %p683 = pneg %p66
        %p684 = pneg %p63
        %p685 = pneg %p87
        %p686 = pneg %p84
        %p687 = pneg %p108
        %p688 = pneg %p105
        %p689 = scmp.lt.s32.totalorder %s38, 1
        %s690 = scalar_select %p689, %s38, 1
        %s691 = scalar_lea.vmem %s3, %s690
        %p692 = pneg %p134
        %p693 = pneg %p131
        %s694 = sand.u32 %s33, 1
        %s695 = scalar_lea.sflag [#allocation4], %s694
        %s696 = sand.u32 %s147, 1
        %s697 = scalar_lea.vmem [#allocation8], %s696
        %p698 = pneg %p160
        %p699 = pneg %p157
        %p700 = scmp.lt.s32.totalorder %s38, 1
        %s701 = scalar_select %p700, %s38, 1
        %s702 = smul.addr %s701, 8
        %s703 = smul.addr %s702, 8
        %s704 = scalar_lea.vmem %s5, %s703
        %p705 = pneg %p186
        %p706 = pneg %p183
        %p707 = scmp.lt.s32.totalorder %s38, 1
        %s708 = scalar_select %p707, %s38, 1
        %s709 = smul.addr %s708, 2
        %s710 = scalar_lea.vmem %s6, %s709
        %p711 = pneg %p212
        %p712 = pneg %p209
        %p713 = scmp.lt.s32.totalorder %s38, 1
        %s714 = scalar_select %p713, %s38, 1
        %s715 = smul.addr %s714, 4
        %s716 = smul.addr %s715, 8
        %s717 = scalar_lea.vmem %s7, %s716
        %p718 = pneg %p238
        %p719 = pneg %p235
        %p720 = scmp.lt.s32.totalorder %s38, 1
        %s721 = scalar_select %p720, %s38, 1
        %s722 = scalar_lea.vmem %s8, %s721
        %p723 = pneg %p264
        %p724 = pneg %p261
        %p725 = scmp.lt.s32.totalorder %s38, 1
        %s726 = scalar_select %p725, %s38, 1
        %s727 = scalar_lea.vmem %s9, %s726
        %p728 = pneg %p290
        %p729 = pneg %p287
        %p730 = scmp.lt.s32.totalorder %s38, 1
        %s731 = scalar_select %p730, %s38, 1
        %s732 = scalar_lea.vmem %s10, %s731
        %p733 = pneg %p316
        %p734 = pneg %p313
        %s735 = sand.u32 %s33, 1
        %s736 = scalar_lea.sflag [#allocation4], %s735
        %s737 = sand.u32 %s329, 1
        %s738 = smul.addr %s737, 32
        %s739 = scalar_lea.vmem [#allocation9], %s738
        %p740 = pneg %p342
        %p741 = pneg %p339
        %p742 = scmp.lt.s32.totalorder %s38, 1
        %s743 = scalar_select %p742, %s38, 1
        %s744 = scalar_lea.vmem %s12, %s743
        %p745 = pneg %p368
        %p746 = pneg %p365
        %p747 = scmp.lt.s32.totalorder %s38, 1
        %s748 = scalar_select %p747, %s38, 1
        %s749 = smul.addr %s748, 8
        %s750 = smul.addr %s749, 8
        %s751 = scalar_lea.vmem %s13, %s750
        %p752 = pneg %p394
        %p753 = pneg %p391
        %p754 = scmp.lt.s32.totalorder %s38, 1
        %s755 = scalar_select %p754, %s38, 1
        %s756 = scalar_lea.vmem %s14, %s755
        %p757 = pneg %p420
        %p758 = pneg %p417
        %p759 = pneg %p441
        %p760 = pneg %p438
        %p761 = pneg %p462
        %p762 = pneg %p459
        %p763 = pneg %p488
        %p764 = pneg %p485
        %s765 = sand.u32 %s475, 1
        %s766 = scalar_lea.sflag [#allocation5], %s765
        %s767 = sand.u32 %s475, 1
        %s768 = smul.addr %s767, 8
        %s769 = scalar_lea.vmem [#allocation10], %s768
        %p770 = scmp.lt.s32.totalorder %s37, 1
        %s771 = scalar_select %p770, %s37, 1
        %s772 = smul.addr %s771, 8
        %s773 = scalar_lea.vmem %s0, %s772
        %p774 = scmp.lt.s32.totalorder %s38, 1
        %s775 = scalar_select %p774, %s38, 1
        %s776 = scalar_lea.vmem %s3, %s775
        %p777 = scmp.lt.s32.totalorder %s38, 1
        %s778 = scalar_select %p777, %s38, 1
        %s779 = smul.addr %s778, 8
        %s780 = smul.addr %s779, 8
        %s781 = scalar_lea.vmem %s5, %s780
        %p782 = scmp.lt.s32.totalorder %s38, 1
        %s783 = scalar_select %p782, %s38, 1
        %s784 = smul.addr %s783, 2
        %s785 = scalar_lea.vmem %s6, %s784
        %p786 = scmp.lt.s32.totalorder %s38, 1
        %s787 = scalar_select %p786, %s38, 1
        %s788 = smul.addr %s787, 4
        %s789 = smul.addr %s788, 8
        %s790 = scalar_lea.vmem %s7, %s789
        %p791 = scmp.lt.s32.totalorder %s38, 1
        %s792 = scalar_select %p791, %s38, 1
        %s793 = scalar_lea.vmem %s8, %s792
        %p794 = scmp.lt.s32.totalorder %s38, 1
        %s795 = scalar_select %p794, %s38, 1
        %s796 = scalar_lea.vmem %s9, %s795
        %p797 = scmp.lt.s32.totalorder %s38, 1
        %s798 = scalar_select %p797, %s38, 1
        %s799 = scalar_lea.vmem %s10, %s798
        %p800 = scmp.lt.s32.totalorder %s38, 1
        %s801 = scalar_select %p800, %s38, 1
        %s802 = scalar_lea.vmem %s12, %s801
        %p803 = scmp.lt.s32.totalorder %s38, 1
        %s804 = scalar_select %p803, %s38, 1
        %s805 = smul.addr %s804, 8
        %s806 = smul.addr %s805, 8
        %s807 = scalar_lea.vmem %s13, %s806
        %p808 = scmp.lt.s32.totalorder %s38, 1
        %s809 = scalar_select %p808, %s38, 1
        %s810 = scalar_lea.vmem %s14, %s809
        %p811 = scmp.eq.s32.totalorder %s38, 0
        // Predicated region
        $region105: #{tpu_custom_call.1} parent=87 // pred_check
          %p812 = pneg %p811
        $region106: #{tpu_custom_call.1} parent=87 // pred_check_branch
          %814 = sbr.rel (%p812) target = $region108
        $region107: #{tpu_custom_call.1} parent=87 // pred_region
          %v815 = vld [vmem:[%s773] sm:$0xff]
          %vm816 = vcmask 261120
          %817 = vst.msk [vmem:[#allocation2] sm:$0xff] %vm816, %v815
        $region108: #{tpu_custom_call.1} parent=87 // pred_fallthru
          _
        %v818 = vld [vmem:[#allocation2] sm:$0xff]
        %v819 = vld [vmem:[#allocation3] sm:$0xff]
        %v820 = vld [vmem:[#allocation6] sm:$0xff]
        %v821 = vlaneseq
        %v822 = vshrl.u32 %v821, 7
        %v823 = vlaneseq
        %v824 = vand.u32 %v823, 127
        %vm825 = vcmp.le.s32.totalorder %v824, %v822
        %v826 = vsel %vm825, 0.0, -1e+30
        %v827 = vld [vmem:[%s776] sm:$0x1]
        %v828 = vld [vmem:[%s665] sm:$0x1]
        %vm829 = vcmask 261120
        %v830 = vsel %vm829, %v818, 0.0
        %831 = vadd.xlane.f32.xlu0 %v830
        %v832 = vpop.xlane.xlu0 %831
        %v833 = vrcp.pop 32.0
        %v834 = vmul.f32 %v832, %v833
        %v835 = vsub.f32 %v818, %v834
        %v836 = vmul.f32 %v835, %v835
        %v837 = vsel %vm829, %v836, 0.0
        %838 = vadd.xlane.f32.xlu0 %v837
        %v839 = vpop.xlane.xlu0 %838
        %v840 = vmul.f32 %v839, %v833
        %v841 = vadd.f32 %v840, 1e-05
        %v842 = vrsqrt.pop %v841
        %v843 = vmul.f32 %v835, %v842
        %v845 = vlaneseq
        %v846 = vshrl.u32 %v845, 7
        %v847 = vsub.s32 0, %v846
        %v848 = vrot.slane %v827, %v847
        %v850 = vmul.f32 %v843, %v848
        %v852 = vlaneseq
        %v853 = vshrl.u32 %v852, 7
        %v854 = vsub.s32 0, %v853
        %v855 = vrot.slane %v828, %v854
        %v857 = vadd.f32 %v850, %v855
        %v858 = vld [vmem:[%s781] sm:$0xff]
        %v859 = vld [vmem:[%s781 + $0x8] sm:$0xff]
        %v860 = vld [vmem:[%s781 + $0x10] sm:$0xff]
        %v861 = vld [vmem:[%s781 + $0x18] sm:$0xff]
        %v862 = vld [vmem:[%s781 + $0x20] sm:$0xff]
        %v863 = vld [vmem:[%s781 + $0x28] sm:$0xff]
        %v864 = vld [vmem:[%s781 + $0x30] sm:$0xff]
        %v865 = vld [vmem:[%s781 + $0x38] sm:$0xff]
        %v866 = vld [vmem:[%s785] sm:$0x3]
        %v868 = vlaneseq
        %v869 = vshrl.u32 %v868, 7
        %v870 = vsub.s32 0, %v869
        %v871 = vrot.slane %v866, %v870
        %v872 = vlaneseq
        %v873 = vshrl.u32 %v872, 7
        %v874 = vsub.s32 1, %v873
        %v875 = vrot.slane %v866, %v874
        %v879 = vsel %vm829, %v857, 0
        %881 = vmatprep.subr.mxu0 %v859
        %882 = vmatpush1.msra.mxu0 %v858
        %883 = vmatprep.subr.mxu0 %v861
        %884 = vmatpush1.msra.mxu0 %v860
        %885 = vmatprep.subr.mxu0 %v863
        %886 = vmatpush1.msra.mxu0 %v862
        %887 = vmatprep.subr.mxu0 %v865
        %888 = vmatpush1.msra.mxu0 %v864
        %889 = vmatprep.subr.mxu0 0.0
        %890 = vmatpush1.msra.mxu0 0.0
        %891 = vmatprep.subr.mxu0 0.0
        %892 = vmatpush1.msra.mxu0 0.0
        %893 = vmatprep.subr.mxu0 0.0
        %894 = vmatpush1.msra.mxu0 0.0
        %895 = vmatprep.subr.mxu0 0.0
        %896 = vmatpush1.msra.mxu0 0.0
        %897 = vmatprep.subr.mxu0 0.0
        %898 = vmatpush1.msra.mxu0 0.0
        %899 = vmatprep.subr.mxu0 0.0
        %900 = vmatpush1.msra.mxu0 0.0
        %901 = vmatprep.subr.mxu0 0.0
        %902 = vmatpush1.msra.mxu0 0.0
        %903 = vmatprep.subr.mxu0 0.0
        %904 = vmatpush1.msra.mxu0 0.0
        %905 = vmatprep.subr.mxu0 0.0
        %906 = vmatpush1.msra.mxu0 0.0
        %907 = vmatprep.subr.mxu0 0.0
        %908 = vmatpush1.msra.mxu0 0.0
        %909 = vmatprep.subr.mxu0 0.0
        %910 = vmatpush1.msra.mxu0 0.0
        %911 = vmatprep.subr.mxu0 0.0
        %912 = vmatpush1.msra.mxu0 0.0
        %913 = vmatprep.subr.mxu0 0.0
        %914 = vmatpush1.msra.mxu0 0.0
        %915 = vmatprep.subr.mxu0 0.0
        %916 = vmatpush1.msra.mxu0 0.0
        %917 = vmatprep.subr.mxu0 0.0
        %918 = vmatpush1.msra.mxu0 0.0
        %919 = vmatprep.subr.mxu0 0.0
        %920 = vmatpush1.msra.mxu0 0.0
        %921 = vmatprep.subr.mxu0 0.0
        %922 = vmatpush1.msra.mxu0 0.0
        %923 = vmatprep.subr.mxu0 0.0
        %924 = vmatpush1.msra.mxu0 0.0
        %925 = vmatprep.subr.mxu0 0.0
        %926 = vmatpush1.msra.mxu0 0.0
        %927 = vmatprep.subr.mxu0 0.0
        %928 = vmatpush1.msra.mxu0 0.0
        %929 = vmatprep.subr.mxu0 0.0
        %930 = vmatpush1.msra.mxu0 0.0
        %931 = vmatprep.subr.mxu0 0.0
        %932 = vmatpush1.msra.mxu0 0.0
        %933 = vmatprep.subr.mxu0 0.0
        %934 = vmatpush1.msra.mxu0 0.0
        %935 = vmatprep.subr.mxu0 0.0
        %936 = vmatpush1.msra.mxu0 0.0
        %937 = vmatprep.subr.mxu0 0.0
        %938 = vmatpush1.msra.mxu0 0.0
        %939 = vmatprep.subr.mxu0 0.0
        %940 = vmatpush1.msra.mxu0 0.0
        %941 = vmatprep.subr.mxu0 0.0
        %942 = vmatpush1.msra.mxu0 0.0
        %943 = vmatprep.subr.mxu0 0.0
        %944 = vmatpush1.msra.mxu0 0.0
        %945 = vmatprep.mubr.f32.mxu0 0.0
        %946 = vmatmul.mubr.f32.gmra.mrb[0].mxu0 %v879
        %v947 = vpop.f32.mrb[0].mxu0
        %v948 = vadd.f32 %v871, %v947
        %v949 = vpop.f32.mrb[0].mxu0
        %v950 = vadd.f32 %v875, %v949
        %951 = vdwg.mxu0
        %v952 = vmul.f32 %v948, %v819
        %954 = vrot.lane.b32.xlu0 %v820, 96
        %v955 = vpop.permute.xlu0 %954
        %v957 = vmul.f32 %v948, %v955
        %959 = vrot.lane.b32.xlu0 %v957, 32
        %v960 = vpop.permute.xlu0 %959
        %v962 = vadd.f32 %v952, %v960
        %964 = vrot.lane.b32.xlu0 %v819, 32
        %v965 = vpop.permute.xlu0 %964
        %v967 = vmul.f32 %v948, %v965
        %v968 = vmul.f32 %v950, %v820
        %970 = vrot.lane.b32.xlu0 %v968, 32
        %v971 = vpop.permute.xlu0 %970
        %v973 = vadd.f32 %v967, %v971
        %975 = vrot.lane.b32.xlu0 %v973, 96
        %v976 = vpop.permute.xlu0 %975
        %vm977 = vcmask 64512
        %v979 = vsel %vm977, %v962, 0
        %v981 = vsel %vm977, %v976, 0
        %983 = vmatprep.subr.mxu0 0.0
        %984 = vmatpush1.xpose.msra.mxu0 %v981
        %985 = vmatprep.subr.mxu0 0.0
        %986 = vmatpush1.xpose.msra.mxu0 0.0
        %987 = vmatprep.subr.mxu0 0.0
        %988 = vmatpush1.xpose.msra.mxu0 0.0
        %989 = vmatprep.subr.mxu0 0.0
        %990 = vmatpush1.xpose.msra.mxu0 0.0
        %991 = vmatprep.subr.mxu0 0.0
        %992 = vmatpush1.xpose.msra.mxu0 0.0
        %993 = vmatprep.subr.mxu0 0.0
        %994 = vmatpush1.xpose.msra.mxu0 0.0
        %995 = vmatprep.subr.mxu0 0.0
        %996 = vmatpush1.xpose.msra.mxu0 0.0
        %997 = vmatprep.subr.mxu0 0.0
        %998 = vmatpush1.xpose.msra.mxu0 0.0
        %999 = vmatprep.subr.mxu0 0.0
        %1000 = vmatpush1.xpose.msra.mxu0 0.0
        %1001 = vmatprep.subr.mxu0 0.0
        %1002 = vmatpush1.xpose.msra.mxu0 0.0
        %1003 = vmatprep.subr.mxu0 0.0
        %1004 = vmatpush1.xpose.msra.mxu0 0.0
        %1005 = vmatprep.subr.mxu0 0.0
        %1006 = vmatpush1.xpose.msra.mxu0 0.0
        %1007 = vmatprep.subr.mxu0 0.0
        %1008 = vmatpush1.xpose.msra.mxu0 0.0
        %1009 = vmatprep.subr.mxu0 0.0
        %1010 = vmatpush1.xpose.msra.mxu0 0.0
        %1011 = vmatprep.subr.mxu0 0.0
        %1012 = vmatpush1.xpose.msra.mxu0 0.0
        %1013 = vmatprep.subr.mxu0 0.0
        %1014 = vmatpush1.xpose.msra.mxu0 0.0
        %1015 = vmatprep.subr.mxu0 0.0
        %1016 = vmatpush1.xpose.msra.mxu0 0.0
        %1017 = vmatprep.subr.mxu0 0.0
        %1018 = vmatpush1.xpose.msra.mxu0 0.0
        %1019 = vmatprep.subr.mxu0 0.0
        %1020 = vmatpush1.xpose.msra.mxu0 0.0
        %1021 = vmatprep.subr.mxu0 0.0
        %1022 = vmatpush1.xpose.msra.mxu0 0.0
        %1023 = vmatprep.subr.mxu0 0.0
        %1024 = vmatpush1.xpose.msra.mxu0 0.0
        %1025 = vmatprep.subr.mxu0 0.0
        %1026 = vmatpush1.xpose.msra.mxu0 0.0
        %1027 = vmatprep.subr.mxu0 0.0
        %1028 = vmatpush1.xpose.msra.mxu0 0.0
        %1029 = vmatprep.subr.mxu0 0.0
        %1030 = vmatpush1.xpose.msra.mxu0 0.0
        %1031 = vmatprep.subr.mxu0 0.0
        %1032 = vmatpush1.xpose.msra.mxu0 0.0
        %1033 = vmatprep.subr.mxu0 0.0
        %1034 = vmatpush1.xpose.msra.mxu0 0.0
        %1035 = vmatprep.subr.mxu0 0.0
        %1036 = vmatpush1.xpose.msra.mxu0 0.0
        %1037 = vmatprep.subr.mxu0 0.0
        %1038 = vmatpush1.xpose.msra.mxu0 0.0
        %1039 = vmatprep.subr.mxu0 0.0
        %1040 = vmatpush1.xpose.msra.mxu0 0.0
        %1041 = vmatprep.subr.mxu0 0.0
        %1042 = vmatpush1.xpose.msra.mxu0 0.0
        %1043 = vmatprep.subr.mxu0 0.0
        %1044 = vmatpush1.xpose.msra.mxu0 0.0
        %1045 = vmatprep.subr.mxu0 0.0
        %1046 = vmatpush1.xpose.msra.mxu0 0.0
        %1047 = vmatprep.mubr.f32.mxu0 0.0
        %1048 = vmatmul.mubr.f32.gmra.mrb[0].mxu0 %v979
        %v1049 = vpop.f32.mrb[0].mxu0
        %v1050 = vadd.f32 %v826, %v1049
        %v1051 = vpop.f32.mrb[0].mxu0
        %1052 = vdwg.mxu0
        %v1053 = vsel %vm977, %v1050, -inf
        %1054 = vmax.xlane.f32.xlu0 %v1053
        %v1055 = vpop.xlane.xlu0 %1054
        %v1056 = vsub.f32 %v1050, %v1055
        %v1057 = vmul.f32 %v1056, 1.442695
        %v1058 = vpow.pop %v1057
        %v1059 = vsel %vm977, %v1058, 0.0
        %1060 = vadd.xlane.f32.xlu0 %v1059
        %v1061 = vpop.xlane.xlu0 %1060
        %v1062 = vrcp.pop %v1061
        %v1063 = vmul.f32 %v1058, %v1062
        %1065 = vrot.lane.b32.xlu0 %v948, 64
        %v1066 = vpop.permute.xlu0 %1065
        %v1069 = vsel %vm977, %v1063, 0
        %1071 = vmatprep.subr.mxu0 0.0
        %1072 = vmatpush1.msra.mxu0 %v1066
        %1073 = vmatprep.subr.mxu0 0.0
        %1074 = vmatpush1.msra.mxu0 0.0
        %1075 = vmatprep.subr.mxu0 0.0
        %1076 = vmatpush1.msra.mxu0 0.0
        %1077 = vmatprep.subr.mxu0 0.0
        %1078 = vmatpush1.msra.mxu0 0.0
        %1079 = vmatprep.subr.mxu0 0.0
        %1080 = vmatpush1.msra.mxu0 0.0
        %1081 = vmatprep.subr.mxu0 0.0
        %1082 = vmatpush1.msra.mxu0 0.0
        %1083 = vmatprep.subr.mxu0 0.0
        %1084 = vmatpush1.msra.mxu0 0.0
        %1085 = vmatprep.subr.mxu0 0.0
        %1086 = vmatpush1.msra.mxu0 0.0
        %1087 = vmatprep.subr.mxu0 0.0
        %1088 = vmatpush1.msra.mxu0 0.0
        %1089 = vmatprep.subr.mxu0 0.0
        %1090 = vmatpush1.msra.mxu0 0.0
        %1091 = vmatprep.subr.mxu0 0.0
        %1092 = vmatpush1.msra.mxu0 0.0
        %1093 = vmatprep.subr.mxu0 0.0
        %1094 = vmatpush1.msra.mxu0 0.0
        %1095 = vmatprep.subr.mxu0 0.0
        %1096 = vmatpush1.msra.mxu0 0.0
        %1097 = vmatprep.subr.mxu0 0.0
        %1098 = vmatpush1.msra.mxu0 0.0
        %1099 = vmatprep.subr.mxu0 0.0
        %1100 = vmatpush1.msra.mxu0 0.0
        %1101 = vmatprep.subr.mxu0 0.0
        %1102 = vmatpush1.msra.mxu0 0.0
        %1103 = vmatprep.subr.mxu0 0.0
        %1104 = vmatpush1.msra.mxu0 0.0
        %1105 = vmatprep.subr.mxu0 0.0
        %1106 = vmatpush1.msra.mxu0 0.0
        %1107 = vmatprep.subr.mxu0 0.0
        %1108 = vmatpush1.msra.mxu0 0.0
        %1109 = vmatprep.subr.mxu0 0.0
        %1110 = vmatpush1.msra.mxu0 0.0
        %1111 = vmatprep.subr.mxu0 0.0
        %1112 = vmatpush1.msra.mxu0 0.0
        %1113 = vmatprep.subr.mxu0 0.0
        %1114 = vmatpush1.msra.mxu0 0.0
        %1115 = vmatprep.subr.mxu0 0.0
        %1116 = vmatpush1.msra.mxu0 0.0
        %1117 = vmatprep.subr.mxu0 0.0
        %1118 = vmatpush1.msra.mxu0 0.0
        %1119 = vmatprep.subr.mxu0 0.0
        %1120 = vmatpush1.msra.mxu0 0.0
        %1121 = vmatprep.subr.mxu0 0.0
        %1122 = vmatpush1.msra.mxu0 0.0
        %1123 = vmatprep.subr.mxu0 0.0
        %1124 = vmatpush1.msra.mxu0 0.0
        %1125 = vmatprep.subr.mxu0 0.0
        %1126 = vmatpush1.msra.mxu0 0.0
        %1127 = vmatprep.subr.mxu0 0.0
        %1128 = vmatpush1.msra.mxu0 0.0
        %1129 = vmatprep.subr.mxu0 0.0
        %1130 = vmatpush1.msra.mxu0 0.0
        %1131 = vmatprep.subr.mxu0 0.0
        %1132 = vmatpush1.msra.mxu0 0.0
        %1133 = vmatprep.subr.mxu0 0.0
        %1134 = vmatpush1.msra.mxu0 0.0
        %1135 = vmatprep.mubr.f32.mxu0 0.0
        %1136 = vmatmul.mubr.f32.gmra.mrb[0].mxu0 %v1069
        %v1137 = vpop.f32.mrb[0].mxu0
        %v1138 = vadd.f32 0.0, %v1137
        %v1139 = vpop.f32.mrb[0].mxu0
        %1140 = vdwg.mxu0
        %1141 = vrot.lane.b32.xlu0 %v962, 120
        %v1142 = vpop.permute.xlu0 %1141
        %1143 = vrot.lane.b32.xlu0 %v973, 88
        %v1144 = vpop.permute.xlu0 %1143
        %v1145 = vsel %vm977, %v1142, 0
        %v1147 = vsel %vm977, %v1144, 0
        %1149 = vmatprep.subr.mxu0 0.0
        %1150 = vmatpush1.xpose.msra.mxu0 %v1147
        %1151 = vmatprep.subr.mxu0 0.0
        %1152 = vmatpush1.xpose.msra.mxu0 0.0
        %1153 = vmatprep.subr.mxu0 0.0
        %1154 = vmatpush1.xpose.msra.mxu0 0.0
        %1155 = vmatprep.subr.mxu0 0.0
        %1156 = vmatpush1.xpose.msra.mxu0 0.0
        %1157 = vmatprep.subr.mxu0 0.0
        %1158 = vmatpush1.xpose.msra.mxu0 0.0
        %1159 = vmatprep.subr.mxu0 0.0
        %1160 = vmatpush1.xpose.msra.mxu0 0.0
        %1161 = vmatprep.subr.mxu0 0.0
        %1162 = vmatpush1.xpose.msra.mxu0 0.0
        %1163 = vmatprep.subr.mxu0 0.0
        %1164 = vmatpush1.xpose.msra.mxu0 0.0
        %1165 = vmatprep.subr.mxu0 0.0
        %1166 = vmatpush1.xpose.msra.mxu0 0.0
        %1167 = vmatprep.subr.mxu0 0.0
        %1168 = vmatpush1.xpose.msra.mxu0 0.0
        %1169 = vmatprep.subr.mxu0 0.0
        %1170 = vmatpush1.xpose.msra.mxu0 0.0
        %1171 = vmatprep.subr.mxu0 0.0
        %1172 = vmatpush1.xpose.msra.mxu0 0.0
        %1173 = vmatprep.subr.mxu0 0.0
        %1174 = vmatpush1.xpose.msra.mxu0 0.0
        %1175 = vmatprep.subr.mxu0 0.0
        %1176 = vmatpush1.xpose.msra.mxu0 0.0
        %1177 = vmatprep.subr.mxu0 0.0
        %1178 = vmatpush1.xpose.msra.mxu0 0.0
        %1179 = vmatprep.subr.mxu0 0.0
        %1180 = vmatpush1.xpose.msra.mxu0 0.0
        %1181 = vmatprep.subr.mxu0 0.0
        %1182 = vmatpush1.xpose.msra.mxu0 0.0
        %1183 = vmatprep.subr.mxu0 0.0
        %1184 = vmatpush1.xpose.msra.mxu0 0.0
        %1185 = vmatprep.subr.mxu0 0.0
        %1186 = vmatpush1.xpose.msra.mxu0 0.0
        %1187 = vmatprep.subr.mxu0 0.0
        %1188 = vmatpush1.xpose.msra.mxu0 0.0
        %1189 = vmatprep.subr.mxu0 0.0
        %1190 = vmatpush1.xpose.msra.mxu0 0.0
        %1191 = vmatprep.subr.mxu0 0.0
        %1192 = vmatpush1.xpose.msra.mxu0 0.0
        %1193 = vmatprep.subr.mxu0 0.0
        %1194 = vmatpush1.xpose.msra.mxu0 0.0
        %1195 = vmatprep.subr.mxu0 0.0
        %1196 = vmatpush1.xpose.msra.mxu0 0.0
        %1197 = vmatprep.subr.mxu0 0.0
        %1198 = vmatpush1.xpose.msra.mxu0 0.0
        %1199 = vmatprep.subr.mxu0 0.0
        %1200 = vmatpush1.xpose.msra.mxu0 0.0
        %1201 = vmatprep.subr.mxu0 0.0
        %1202 = vmatpush1.xpose.msra.mxu0 0.0
        %1203 = vmatprep.subr.mxu0 0.0
        %1204 = vmatpush1.xpose.msra.mxu0 0.0
        %1205 = vmatprep.subr.mxu0 0.0
        %1206 = vmatpush1.xpose.msra.mxu0 0.0
        %1207 = vmatprep.subr.mxu0 0.0
        %1208 = vmatpush1.xpose.msra.mxu0 0.0
        %1209 = vmatprep.subr.mxu0 0.0
        %1210 = vmatpush1.xpose.msra.mxu0 0.0
        %1211 = vmatprep.subr.mxu0 0.0
        %1212 = vmatpush1.xpose.msra.mxu0 0.0
        %1213 = vmatprep.mubr.f32.mxu0 0.0
        %1214 = vmatmul.mubr.f32.gmra.mrb[0].mxu0 %v1145
        %v1215 = vpop.f32.mrb[0].mxu0
        %v1216 = vadd.f32 %v826, %v1215
        %v1217 = vpop.f32.mrb[0].mxu0
        %1218 = vdwg.mxu0
        %v1219 = vsel %vm977, %v1216, -inf
        %1220 = vmax.xlane.f32.xlu0 %v1219
        %v1221 = vpop.xlane.xlu0 %1220
        %v1222 = vsub.f32 %v1216, %v1221
        %v1223 = vmul.f32 %v1222, 1.442695
        %v1224 = vpow.pop %v1223
        %v1225 = vsel %vm977, %v1224, 0.0
        %1226 = vadd.xlane.f32.xlu0 %v1225
        %v1227 = vpop.xlane.xlu0 %1226
        %v1228 = vrcp.pop %v1227
        %v1229 = vmul.f32 %v1224, %v1228
        %1230 = vrot.lane.b32.xlu0 %v948, 56
        %v1231 = vpop.permute.xlu0 %1230
        %v1234 = vsel %vm977, %v1229, 0
        %1236 = vmatprep.subr.mxu0 0.0
        %1237 = vmatpush1.msra.mxu0 %v1231
        %1238 = vmatprep.subr.mxu0 0.0
        %1239 = vmatpush1.msra.mxu0 0.0
        %1240 = vmatprep.subr.mxu0 0.0
        %1241 = vmatpush1.msra.mxu0 0.0
        %1242 = vmatprep.subr.mxu0 0.0
        %1243 = vmatpush1.msra.mxu0 0.0
        %1244 = vmatprep.subr.mxu0 0.0
        %1245 = vmatpush1.msra.mxu0 0.0
        %1246 = vmatprep.subr.mxu0 0.0
        %1247 = vmatpush1.msra.mxu0 0.0
        %1248 = vmatprep.subr.mxu0 0.0
        %1249 = vmatpush1.msra.mxu0 0.0
        %1250 = vmatprep.subr.mxu0 0.0
        %1251 = vmatpush1.msra.mxu0 0.0
        %1252 = vmatprep.subr.mxu0 0.0
        %1253 = vmatpush1.msra.mxu0 0.0
        %1254 = vmatprep.subr.mxu0 0.0
        %1255 = vmatpush1.msra.mxu0 0.0
        %1256 = vmatprep.subr.mxu0 0.0
        %1257 = vmatpush1.msra.mxu0 0.0
        %1258 = vmatprep.subr.mxu0 0.0
        %1259 = vmatpush1.msra.mxu0 0.0
        %1260 = vmatprep.subr.mxu0 0.0
        %1261 = vmatpush1.msra.mxu0 0.0
        %1262 = vmatprep.subr.mxu0 0.0
        %1263 = vmatpush1.msra.mxu0 0.0
        %1264 = vmatprep.subr.mxu0 0.0
        %1265 = vmatpush1.msra.mxu0 0.0
        %1266 = vmatprep.subr.mxu0 0.0
        %1267 = vmatpush1.msra.mxu0 0.0
        %1268 = vmatprep.subr.mxu0 0.0
        %1269 = vmatpush1.msra.mxu0 0.0
        %1270 = vmatprep.subr.mxu0 0.0
        %1271 = vmatpush1.msra.mxu0 0.0
        %1272 = vmatprep.subr.mxu0 0.0
        %1273 = vmatpush1.msra.mxu0 0.0
        %1274 = vmatprep.subr.mxu0 0.0
        %1275 = vmatpush1.msra.mxu0 0.0
        %1276 = vmatprep.subr.mxu0 0.0
        %1277 = vmatpush1.msra.mxu0 0.0
        %1278 = vmatprep.subr.mxu0 0.0
        %1279 = vmatpush1.msra.mxu0 0.0
        %1280 = vmatprep.subr.mxu0 0.0
        %1281 = vmatpush1.msra.mxu0 0.0
        %1282 = vmatprep.subr.mxu0 0.0
        %1283 = vmatpush1.msra.mxu0 0.0
        %1284 = vmatprep.subr.mxu0 0.0
        %1285 = vmatpush1.msra.mxu0 0.0
        %1286 = vmatprep.subr.mxu0 0.0
        %1287 = vmatpush1.msra.mxu0 0.0
        %1288 = vmatprep.subr.mxu0 0.0
        %1289 = vmatpush1.msra.mxu0 0.0
        %1290 = vmatprep.subr.mxu0 0.0
        %1291 = vmatpush1.msra.mxu0 0.0
        %1292 = vmatprep.subr.mxu0 0.0
        %1293 = vmatpush1.msra.mxu0 0.0
        %1294 = vmatprep.subr.mxu0 0.0
        %1295 = vmatpush1.msra.mxu0 0.0
        %1296 = vmatprep.subr.mxu0 0.0
        %1297 = vmatpush1.msra.mxu0 0.0
        %1298 = vmatprep.subr.mxu0 0.0
        %1299 = vmatpush1.msra.mxu0 0.0
        %1300 = vmatprep.mubr.f32.mxu0 0.0
        %1301 = vmatmul.mubr.f32.gmra.mrb[0].mxu0 %v1234
        %v1302 = vpop.f32.mrb[0].mxu0
        %v1303 = vadd.f32 0.0, %v1302
        %v1304 = vpop.f32.mrb[0].mxu0
        %1305 = vdwg.mxu0
        %1306 = vrot.lane.b32.xlu0 %v962, 112
        %v1307 = vpop.permute.xlu0 %1306
        %1308 = vrot.lane.b32.xlu0 %v973, 80
        %v1309 = vpop.permute.xlu0 %1308
        %v1310 = vsel %vm977, %v1307, 0
        %v1312 = vsel %vm977, %v1309, 0
        %1314 = vmatprep.subr.mxu0 0.0
        %1315 = vmatpush1.xpose.msra.mxu0 %v1312
        %1316 = vmatprep.subr.mxu0 0.0
        %1317 = vmatpush1.xpose.msra.mxu0 0.0
        %1318 = vmatprep.subr.mxu0 0.0
        %1319 = vmatpush1.xpose.msra.mxu0 0.0
        %1320 = vmatprep.subr.mxu0 0.0
        %1321 = vmatpush1.xpose.msra.mxu0 0.0
        %1322 = vmatprep.subr.mxu0 0.0
        %1323 = vmatpush1.xpose.msra.mxu0 0.0
        %1324 = vmatprep.subr.mxu0 0.0
        %1325 = vmatpush1.xpose.msra.mxu0 0.0
        %1326 = vmatprep.subr.mxu0 0.0
        %1327 = vmatpush1.xpose.msra.mxu0 0.0
        %1328 = vmatprep.subr.mxu0 0.0
        %1329 = vmatpush1.xpose.msra.mxu0 0.0
        %1330 = vmatprep.subr.mxu0 0.0
        %1331 = vmatpush1.xpose.msra.mxu0 0.0
        %1332 = vmatprep.subr.mxu0 0.0
        %1333 = vmatpush1.xpose.msra.mxu0 0.0
        %1334 = vmatprep.subr.mxu0 0.0
        %1335 = vmatpush1.xpose.msra.mxu0 0.0
        %1336 = vmatprep.subr.mxu0 0.0
        %1337 = vmatpush1.xpose.msra.mxu0 0.0
        %1338 = vmatprep.subr.mxu0 0.0
        %1339 = vmatpush1.xpose.msra.mxu0 0.0
        %1340 = vmatprep.subr.mxu0 0.0
        %1341 = vmatpush1.xpose.msra.mxu0 0.0
        %1342 = vmatprep.subr.mxu0 0.0
        %1343 = vmatpush1.xpose.msra.mxu0 0.0
        %1344 = vmatprep.subr.mxu0 0.0
        %1345 = vmatpush1.xpose.msra.mxu0 0.0
        %1346 = vmatprep.subr.mxu0 0.0
        %1347 = vmatpush1.xpose.msra.mxu0 0.0
        %1348 = vmatprep.subr.mxu0 0.0
        %1349 = vmatpush1.xpose.msra.mxu0 0.0
        %1350 = vmatprep.subr.mxu0 0.0
        %1351 = vmatpush1.xpose.msra.mxu0 0.0
        %1352 = vmatprep.subr.mxu0 0.0
        %1353 = vmatpush1.xpose.msra.mxu0 0.0
        %1354 = vmatprep.subr.mxu0 0.0
        %1355 = vmatpush1.xpose.msra.mxu0 0.0
        %1356 = vmatprep.subr.mxu0 0.0
        %1357 = vmatpush1.xpose.msra.mxu0 0.0
        %1358 = vmatprep.subr.mxu0 0.0
        %1359 = vmatpush1.xpose.msra.mxu0 0.0
        %1360 = vmatprep.subr.mxu0 0.0
        %1361 = vmatpush1.xpose.msra.mxu0 0.0
        %1362 = vmatprep.subr.mxu0 0.0
        %1363 = vmatpush1.xpose.msra.mxu0 0.0
        %1364 = vmatprep.subr.mxu0 0.0
        %1365 = vmatpush1.xpose.msra.mxu0 0.0
        %1366 = vmatprep.subr.mxu0 0.0
        %1367 = vmatpush1.xpose.msra.mxu0 0.0
        %1368 = vmatprep.subr.mxu0 0.0
        %1369 = vmatpush1.xpose.msra.mxu0 0.0
        %1370 = vmatprep.subr.mxu0 0.0
        %1371 = vmatpush1.xpose.msra.mxu0 0.0
        %1372 = vmatprep.subr.mxu0 0.0
        %1373 = vmatpush1.xpose.msra.mxu0 0.0
        %1374 = vmatprep.subr.mxu0 0.0
        %1375 = vmatpush1.xpose.msra.mxu0 0.0
        %1376 = vmatprep.subr.mxu0 0.0
        %1377 = vmatpush1.xpose.msra.mxu0 0.0
        %1378 = vmatprep.mubr.f32.mxu0 0.0
        %1379 = vmatmul.mubr.f32.gmra.mrb[0].mxu0 %v1310
        %v1380 = vpop.f32.mrb[0].mxu0
        %v1381 = vadd.f32 %v826, %v1380
        %v1382 = vpop.f32.mrb[0].mxu0
        %1383 = vdwg.mxu0
        %v1384 = vsel %vm977, %v1381, -inf
        %1385 = vmax.xlane.f32.xlu0 %v1384
        %v1386 = vpop.xlane.xlu0 %1385
        %v1387 = vsub.f32 %v1381, %v1386
        %v1388 = vmul.f32 %v1387, 1.442695
        %v1389 = vpow.pop %v1388
        %v1390 = vsel %vm977, %v1389, 0.0
        %1391 = vadd.xlane.f32.xlu0 %v1390
        %v1392 = vpop.xlane.xlu0 %1391
        %v1393 = vrcp.pop %v1392
        %v1394 = vmul.f32 %v1389, %v1393
        %1395 = vrot.lane.b32.xlu0 %v948, 48
        %v1396 = vpop.permute.xlu0 %1395
        %v1399 = vsel %vm977, %v1394, 0
        %1401 = vmatprep.subr.mxu0 0.0
        %1402 = vmatpush1.msra.mxu0 %v1396
        %1403 = vmatprep.subr.mxu0 0.0
        %1404 = vmatpush1.msra.mxu0 0.0
        %1405 = vmatprep.subr.mxu0 0.0
        %1406 = vmatpush1.msra.mxu0 0.0
        %1407 = vmatprep.subr.mxu0 0.0
        %1408 = vmatpush1.msra.mxu0 0.0
        %1409 = vmatprep.subr.mxu0 0.0
        %1410 = vmatpush1.msra.mxu0 0.0
        %1411 = vmatprep.subr.mxu0 0.0
        %1412 = vmatpush1.msra.mxu0 0.0
        %1413 = vmatprep.subr.mxu0 0.0
        %1414 = vmatpush1.msra.mxu0 0.0
        %1415 = vmatprep.subr.mxu0 0.0
        %1416 = vmatpush1.msra.mxu0 0.0
        %1417 = vmatprep.subr.mxu0 0.0
        %1418 = vmatpush1.msra.mxu0 0.0
        %1419 = vmatprep.subr.mxu0 0.0
        %1420 = vmatpush1.msra.mxu0 0.0
        %1421 = vmatprep.subr.mxu0 0.0
        %1422 = vmatpush1.msra.mxu0 0.0
        %1423 = vmatprep.subr.mxu0 0.0
        %1424 = vmatpush1.msra.mxu0 0.0
        %1425 = vmatprep.subr.mxu0 0.0
        %1426 = vmatpush1.msra.mxu0 0.0
        %1427 = vmatprep.subr.mxu0 0.0
        %1428 = vmatpush1.msra.mxu0 0.0
        %1429 = vmatprep.subr.mxu0 0.0
        %1430 = vmatpush1.msra.mxu0 0.0
        %1431 = vmatprep.subr.mxu0 0.0
        %1432 = vmatpush1.msra.mxu0 0.0
        %1433 = vmatprep.subr.mxu0 0.0
        %1434 = vmatpush1.msra.mxu0 0.0
        %1435 = vmatprep.subr.mxu0 0.0
        %1436 = vmatpush1.msra.mxu0 0.0
        %1437 = vmatprep.subr.mxu0 0.0
        %1438 = vmatpush1.msra.mxu0 0.0
        %1439 = vmatprep.subr.mxu0 0.0
        %1440 = vmatpush1.msra.mxu0 0.0
        %1441 = vmatprep.subr.mxu0 0.0
        %1442 = vmatpush1.msra.mxu0 0.0
        %1443 = vmatprep.subr.mxu0 0.0
        %1444 = vmatpush1.msra.mxu0 0.0
        %1445 = vmatprep.subr.mxu0 0.0
        %1446 = vmatpush1.msra.mxu0 0.0
        %1447 = vmatprep.subr.mxu0 0.0
        %1448 = vmatpush1.msra.mxu0 0.0
        %1449 = vmatprep.subr.mxu0 0.0
        %1450 = vmatpush1.msra.mxu0 0.0
        %1451 = vmatprep.subr.mxu0 0.0
        %1452 = vmatpush1.msra.mxu0 0.0
        %1453 = vmatprep.subr.mxu0 0.0
        %1454 = vmatpush1.msra.mxu0 0.0
        %1455 = vmatprep.subr.mxu0 0.0
        %1456 = vmatpush1.msra.mxu0 0.0
        %1457 = vmatprep.subr.mxu0 0.0
        %1458 = vmatpush1.msra.mxu0 0.0
        %1459 = vmatprep.subr.mxu0 0.0
        %1460 = vmatpush1.msra.mxu0 0.0
        %1461 = vmatprep.subr.mxu0 0.0
        %1462 = vmatpush1.msra.mxu0 0.0
        %1463 = vmatprep.subr.mxu0 0.0
        %1464 = vmatpush1.msra.mxu0 0.0
        %1465 = vmatprep.mubr.f32.mxu0 0.0
        %1466 = vmatmul.mubr.f32.gmra.mrb[0].mxu0 %v1399
        %v1467 = vpop.f32.mrb[0].mxu0
        %v1468 = vadd.f32 0.0, %v1467
        %v1469 = vpop.f32.mrb[0].mxu0
        %1470 = vdwg.mxu0
        %1471 = vrot.lane.b32.xlu0 %v962, 104
        %v1472 = vpop.permute.xlu0 %1471
        %1473 = vrot.lane.b32.xlu0 %v973, 72
        %v1474 = vpop.permute.xlu0 %1473
        %v1475 = vsel %vm977, %v1472, 0
        %v1477 = vsel %vm977, %v1474, 0
        %1479 = vmatprep.subr.mxu0 0.0
        %1480 = vmatpush1.xpose.msra.mxu0 %v1477
        %1481 = vmatprep.subr.mxu0 0.0
        %1482 = vmatpush1.xpose.msra.mxu0 0.0
        %1483 = vmatprep.subr.mxu0 0.0
        %1484 = vmatpush1.xpose.msra.mxu0 0.0
        %1485 = vmatprep.subr.mxu0 0.0
        %1486 = vmatpush1.xpose.msra.mxu0 0.0
        %1487 = vmatprep.subr.mxu0 0.0
        %1488 = vmatpush1.xpose.msra.mxu0 0.0
        %1489 = vmatprep.subr.mxu0 0.0
        %1490 = vmatpush1.xpose.msra.mxu0 0.0
        %1491 = vmatprep.subr.mxu0 0.0
        %1492 = vmatpush1.xpose.msra.mxu0 0.0
        %1493 = vmatprep.subr.mxu0 0.0
        %1494 = vmatpush1.xpose.msra.mxu0 0.0
        %1495 = vmatprep.subr.mxu0 0.0
        %1496 = vmatpush1.xpose.msra.mxu0 0.0
        %1497 = vmatprep.subr.mxu0 0.0
        %1498 = vmatpush1.xpose.msra.mxu0 0.0
        %1499 = vmatprep.subr.mxu0 0.0
        %1500 = vmatpush1.xpose.msra.mxu0 0.0
        %1501 = vmatprep.subr.mxu0 0.0
        %1502 = vmatpush1.xpose.msra.mxu0 0.0
        %1503 = vmatprep.subr.mxu0 0.0
        %1504 = vmatpush1.xpose.msra.mxu0 0.0
        %1505 = vmatprep.subr.mxu0 0.0
        %1506 = vmatpush1.xpose.msra.mxu0 0.0
        %1507 = vmatprep.subr.mxu0 0.0
        %1508 = vmatpush1.xpose.msra.mxu0 0.0
        %1509 = vmatprep.subr.mxu0 0.0
        %1510 = vmatpush1.xpose.msra.mxu0 0.0
        %1511 = vmatprep.subr.mxu0 0.0
        %1512 = vmatpush1.xpose.msra.mxu0 0.0
        %1513 = vmatprep.subr.mxu0 0.0
        %1514 = vmatpush1.xpose.msra.mxu0 0.0
        %1515 = vmatprep.subr.mxu0 0.0
        %1516 = vmatpush1.xpose.msra.mxu0 0.0
        %1517 = vmatprep.subr.mxu0 0.0
        %1518 = vmatpush1.xpose.msra.mxu0 0.0
        %1519 = vmatprep.subr.mxu0 0.0
        %1520 = vmatpush1.xpose.msra.mxu0 0.0
        %1521 = vmatprep.subr.mxu0 0.0
        %1522 = vmatpush1.xpose.msra.mxu0 0.0
        %1523 = vmatprep.subr.mxu0 0.0
        %1524 = vmatpush1.xpose.msra.mxu0 0.0
        %1525 = vmatprep.subr.mxu0 0.0
        %1526 = vmatpush1.xpose.msra.mxu0 0.0
        %1527 = vmatprep.subr.mxu0 0.0
        %1528 = vmatpush1.xpose.msra.mxu0 0.0
        %1529 = vmatprep.subr.mxu0 0.0
        %1530 = vmatpush1.xpose.msra.mxu0 0.0
        %1531 = vmatprep.subr.mxu0 0.0
        %1532 = vmatpush1.xpose.msra.mxu0 0.0
        %1533 = vmatprep.subr.mxu0 0.0
        %1534 = vmatpush1.xpose.msra.mxu0 0.0
        %1535 = vmatprep.subr.mxu0 0.0
        %1536 = vmatpush1.xpose.msra.mxu0 0.0
        %1537 = vmatprep.subr.mxu0 0.0
        %1538 = vmatpush1.xpose.msra.mxu0 0.0
        %1539 = vmatprep.subr.mxu0 0.0
        %1540 = vmatpush1.xpose.msra.mxu0 0.0
        %1541 = vmatprep.subr.mxu0 0.0
        %1542 = vmatpush1.xpose.msra.mxu0 0.0
        %1543 = vmatprep.mubr.f32.mxu0 0.0
        %1544 = vmatmul.mubr.f32.gmra.mrb[0].mxu0 %v1475
        %v1545 = vpop.f32.mrb[0].mxu0
        %v1546 = vadd.f32 %v826, %v1545
        %v1547 = vpop.f32.mrb[0].mxu0
        %1548 = vdwg.mxu0
        %v1549 = vsel %vm977, %v1546, -inf
        %1550 = vmax.xlane.f32.xlu0 %v1549
        %v1551 = vpop.xlane.xlu0 %1550
        %v1552 = vsub.f32 %v1546, %v1551
        %v1553 = vmul.f32 %v1552, 1.442695
        %v1554 = vpow.pop %v1553
        %v1555 = vsel %vm977, %v1554, 0.0
        %1556 = vadd.xlane.f32.xlu0 %v1555
        %v1557 = vpop.xlane.xlu0 %1556
        %v1558 = vrcp.pop %v1557
        %v1559 = vmul.f32 %v1554, %v1558
        %1560 = vrot.lane.b32.xlu0 %v948, 40
        %v1561 = vpop.permute.xlu0 %1560
        %v1564 = vsel %vm977, %v1559, 0
        %1566 = vmatprep.subr.mxu0 0.0
        %1567 = vmatpush1.msra.mxu0 %v1561
        %1568 = vmatprep.subr.mxu0 0.0
        %1569 = vmatpush1.msra.mxu0 0.0
        %1570 = vmatprep.subr.mxu0 0.0
        %1571 = vmatpush1.msra.mxu0 0.0
        %1572 = vmatprep.subr.mxu0 0.0
        %1573 = vmatpush1.msra.mxu0 0.0
        %1574 = vmatprep.subr.mxu0 0.0
        %1575 = vmatpush1.msra.mxu0 0.0
        %1576 = vmatprep.subr.mxu0 0.0
        %1577 = vmatpush1.msra.mxu0 0.0
        %1578 = vmatprep.subr.mxu0 0.0
        %1579 = vmatpush1.msra.mxu0 0.0
        %1580 = vmatprep.subr.mxu0 0.0
        %1581 = vmatpush1.msra.mxu0 0.0
        %1582 = vmatprep.subr.mxu0 0.0
        %1583 = vmatpush1.msra.mxu0 0.0
        %1584 = vmatprep.subr.mxu0 0.0
        %1585 = vmatpush1.msra.mxu0 0.0
        %1586 = vmatprep.subr.mxu0 0.0
        %1587 = vmatpush1.msra.mxu0 0.0
        %1588 = vmatprep.subr.mxu0 0.0
        %1589 = vmatpush1.msra.mxu0 0.0
        %1590 = vmatprep.subr.mxu0 0.0
        %1591 = vmatpush1.msra.mxu0 0.0
        %1592 = vmatprep.subr.mxu0 0.0
        %1593 = vmatpush1.msra.mxu0 0.0
        %1594 = vmatprep.subr.mxu0 0.0
        %1595 = vmatpush1.msra.mxu0 0.0
        %1596 = vmatprep.subr.mxu0 0.0
        %1597 = vmatpush1.msra.mxu0 0.0
        %1598 = vmatprep.subr.mxu0 0.0
        %1599 = vmatpush1.msra.mxu0 0.0
        %1600 = vmatprep.subr.mxu0 0.0
        %1601 = vmatpush1.msra.mxu0 0.0
        %1602 = vmatprep.subr.mxu0 0.0
        %1603 = vmatpush1.msra.mxu0 0.0
        %1604 = vmatprep.subr.mxu0 0.0
        %1605 = vmatpush1.msra.mxu0 0.0
        %1606 = vmatprep.subr.mxu0 0.0
        %1607 = vmatpush1.msra.mxu0 0.0
        %1608 = vmatprep.subr.mxu0 0.0
        %1609 = vmatpush1.msra.mxu0 0.0
        %1610 = vmatprep.subr.mxu0 0.0
        %1611 = vmatpush1.msra.mxu0 0.0
        %1612 = vmatprep.subr.mxu0 0.0
        %1613 = vmatpush1.msra.mxu0 0.0
        %1614 = vmatprep.subr.mxu0 0.0
        %1615 = vmatpush1.msra.mxu0 0.0
        %1616 = vmatprep.subr.mxu0 0.0
        %1617 = vmatpush1.msra.mxu0 0.0
        %1618 = vmatprep.subr.mxu0 0.0
        %1619 = vmatpush1.msra.mxu0 0.0
        %1620 = vmatprep.subr.mxu0 0.0
        %1621 = vmatpush1.msra.mxu0 0.0
        %1622 = vmatprep.subr.mxu0 0.0
        %1623 = vmatpush1.msra.mxu0 0.0
        %1624 = vmatprep.subr.mxu0 0.0
        %1625 = vmatpush1.msra.mxu0 0.0
        %1626 = vmatprep.subr.mxu0 0.0
        %1627 = vmatpush1.msra.mxu0 0.0
        %1628 = vmatprep.subr.mxu0 0.0
        %1629 = vmatpush1.msra.mxu0 0.0
        %1630 = vmatprep.mubr.f32.mxu0 0.0
        %1631 = vmatmul.mubr.f32.gmra.mrb[0].mxu0 %v1564
        %v1632 = vpop.f32.mrb[0].mxu0
        %v1633 = vadd.f32 0.0, %v1632
        %v1634 = vpop.f32.mrb[0].mxu0
        %1635 = vdwg.mxu0
        %1637 = vrot.lane.b32.xlu0 %v1303, 8
        %v1638 = vpop.permute.xlu0 %1637
        %1641 = vrot.lane.b32.xlu0 %v1468, 16
        %v1642 = vpop.permute.xlu0 %1641
        %1645 = vrot.lane.b32.xlu0 %v1633, 24
        %v1646 = vpop.permute.xlu0 %1645
        %v1648 = vsel %vm977, %v1138, %v1638
        %vm1649 = vcmask 130048
        %v1650 = vsel %vm1649, %v1648, %v1642
        %vm1651 = vcmask 195584
        %v1652 = vsel %vm1651, %v1650, %v1646
        %v1653 = vld [vmem:[%s790] sm:$0xff]
        %v1654 = vld [vmem:[%s790 + $0x8] sm:$0xff]
        %v1655 = vld [vmem:[%s790 + $0x10] sm:$0xff]
        %v1656 = vld [vmem:[%s790 + $0x18] sm:$0xff]
        %v1657 = vld [vmem:[%s793] sm:$0x1]
        %v1659 = vlaneseq
        %v1660 = vshrl.u32 %v1659, 7
        %v1661 = vsub.s32 0, %v1660
        %v1662 = vrot.slane %v1657, %v1661
        %v1665 = vsel %vm829, %v1652, 0
        %1667 = vmatprep.subr.mxu0 0.0
        %1668 = vmatpush1.msra.mxu0 %v1653
        %1669 = vmatprep.subr.mxu0 0.0
        %1670 = vmatpush1.msra.mxu0 %v1654
        %1671 = vmatprep.subr.mxu0 0.0
        %1672 = vmatpush1.msra.mxu0 %v1655
        %1673 = vmatprep.subr.mxu0 0.0
        %1674 = vmatpush1.msra.mxu0 %v1656
        %1675 = vmatprep.subr.mxu0 0.0
        %1676 = vmatpush1.msra.mxu0 0.0
        %1677 = vmatprep.subr.mxu0 0.0
        %1678 = vmatpush1.msra.mxu0 0.0
        %1679 = vmatprep.subr.mxu0 0.0
        %1680 = vmatpush1.msra.mxu0 0.0
        %1681 = vmatprep.subr.mxu0 0.0
        %1682 = vmatpush1.msra.mxu0 0.0
        %1683 = vmatprep.subr.mxu0 0.0
        %1684 = vmatpush1.msra.mxu0 0.0
        %1685 = vmatprep.subr.mxu0 0.0
        %1686 = vmatpush1.msra.mxu0 0.0
        %1687 = vmatprep.subr.mxu0 0.0
        %1688 = vmatpush1.msra.mxu0 0.0
        %1689 = vmatprep.subr.mxu0 0.0
        %1690 = vmatpush1.msra.mxu0 0.0
        %1691 = vmatprep.subr.mxu0 0.0
        %1692 = vmatpush1.msra.mxu0 0.0
        %1693 = vmatprep.subr.mxu0 0.0
        %1694 = vmatpush1.msra.mxu0 0.0
        %1695 = vmatprep.subr.mxu0 0.0
        %1696 = vmatpush1.msra.mxu0 0.0
        %1697 = vmatprep.subr.mxu0 0.0
        %1698 = vmatpush1.msra.mxu0 0.0
        %1699 = vmatprep.subr.mxu0 0.0
        %1700 = vmatpush1.msra.mxu0 0.0
        %1701 = vmatprep.subr.mxu0 0.0
        %1702 = vmatpush1.msra.mxu0 0.0
        %1703 = vmatprep.subr.mxu0 0.0
        %1704 = vmatpush1.msra.mxu0 0.0
        %1705 = vmatprep.subr.mxu0 0.0
        %1706 = vmatpush1.msra.mxu0 0.0
        %1707 = vmatprep.subr.mxu0 0.0
        %1708 = vmatpush1.msra.mxu0 0.0
        %1709 = vmatprep.subr.mxu0 0.0
        %1710 = vmatpush1.msra.mxu0 0.0
        %1711 = vmatprep.subr.mxu0 0.0
        %1712 = vmatpush1.msra.mxu0 0.0
        %1713 = vmatprep.subr.mxu0 0.0
        %1714 = vmatpush1.msra.mxu0 0.0
        %1715 = vmatprep.subr.mxu0 0.0
        %1716 = vmatpush1.msra.mxu0 0.0
        %1717 = vmatprep.subr.mxu0 0.0
        %1718 = vmatpush1.msra.mxu0 0.0
        %1719 = vmatprep.subr.mxu0 0.0
        %1720 = vmatpush1.msra.mxu0 0.0
        %1721 = vmatprep.subr.mxu0 0.0
        %1722 = vmatpush1.msra.mxu0 0.0
        %1723 = vmatprep.subr.mxu0 0.0
        %1724 = vmatpush1.msra.mxu0 0.0
        %1725 = vmatprep.subr.mxu0 0.0
        %1726 = vmatpush1.msra.mxu0 0.0
        %1727 = vmatprep.subr.mxu0 0.0
        %1728 = vmatpush1.msra.mxu0 0.0
        %1729 = vmatprep.subr.mxu0 0.0
        %1730 = vmatpush1.msra.mxu0 0.0
        %1731 = vmatprep.mubr.f32.mxu0 0.0
        %1732 = vmatmul.mubr.f32.gmra.mrb[0].mxu0 %v1665
        %v1733 = vpop.f32.mrb[0].mxu0
        %v1734 = vadd.f32 %v1662, %v1733
        %v1735 = vpop.f32.mrb[0].mxu0
        %1736 = vdwg.mxu0
        %v1737 = vadd.f32 %v818, %v1734
        %v1738 = vld [vmem:[%s796] sm:$0x1]
        %v1739 = vld [vmem:[%s799] sm:$0x1]
        %v1740 = vsel %vm829, %v1737, 0.0
        %1741 = vadd.xlane.f32.xlu0 %v1740
        %v1742 = vpop.xlane.xlu0 %1741
        %v1743 = vmul.f32 %v1742, %v833
        %v1744 = vsub.f32 %v1737, %v1743
        %v1745 = vmul.f32 %v1744, %v1744
        %v1746 = vsel %vm829, %v1745, 0.0
        %1747 = vadd.xlane.f32.xlu0 %v1746
        %v1748 = vpop.xlane.xlu0 %1747
        %v1749 = vmul.f32 %v1748, %v833
        %v1750 = vadd.f32 %v1749, 1e-05
        %v1751 = vrsqrt.pop %v1750
        %v1752 = vmul.f32 %v1744, %v1751
        %v1754 = vlaneseq
        %v1755 = vshrl.u32 %v1754, 7
        %v1756 = vsub.s32 0, %v1755
        %v1757 = vrot.slane %v1738, %v1756
        %v1759 = vmul.f32 %v1752, %v1757
        %v1761 = vlaneseq
        %v1762 = vshrl.u32 %v1761, 7
        %v1763 = vsub.s32 0, %v1762
        %v1764 = vrot.slane %v1739, %v1763
        %v1766 = vadd.f32 %v1759, %v1764
        %v1767 = vld [vmem:[%s674] sm:$0xff]
        %v1768 = vld [vmem:[%s674 + $0x8] sm:$0xff]
        %v1769 = vld [vmem:[%s674 + $0x10] sm:$0xff]
        %v1770 = vld [vmem:[%s674 + $0x18] sm:$0xff]
        %v1771 = vld [vmem:[%s802] sm:$0x1]
        %v1773 = vlaneseq
        %v1774 = vshrl.u32 %v1773, 7
        %v1775 = vsub.s32 0, %v1774
        %v1776 = vrot.slane %v1771, %v1775
        %v1779 = vsel %vm829, %v1766, 0
        %1781 = vmatprep.subr.mxu0 0.0
        %1782 = vmatpush1.msra.mxu0 %v1767
        %1783 = vmatprep.subr.mxu0 0.0
        %1784 = vmatpush1.msra.mxu0 %v1768
        %1785 = vmatprep.subr.mxu0 0.0
        %1786 = vmatpush1.msra.mxu0 %v1769
        %1787 = vmatprep.subr.mxu0 0.0
        %1788 = vmatpush1.msra.mxu0 %v1770
        %1789 = vmatprep.subr.mxu0 0.0
        %1790 = vmatpush1.msra.mxu0 0.0
        %1791 = vmatprep.subr.mxu0 0.0
        %1792 = vmatpush1.msra.mxu0 0.0
        %1793 = vmatprep.subr.mxu0 0.0
        %1794 = vmatpush1.msra.mxu0 0.0
        %1795 = vmatprep.subr.mxu0 0.0
        %1796 = vmatpush1.msra.mxu0 0.0
        %1797 = vmatprep.subr.mxu0 0.0
        %1798 = vmatpush1.msra.mxu0 0.0
        %1799 = vmatprep.subr.mxu0 0.0
        %1800 = vmatpush1.msra.mxu0 0.0
        %1801 = vmatprep.subr.mxu0 0.0
        %1802 = vmatpush1.msra.mxu0 0.0
        %1803 = vmatprep.subr.mxu0 0.0
        %1804 = vmatpush1.msra.mxu0 0.0
        %1805 = vmatprep.subr.mxu0 0.0
        %1806 = vmatpush1.msra.mxu0 0.0
        %1807 = vmatprep.subr.mxu0 0.0
        %1808 = vmatpush1.msra.mxu0 0.0
        %1809 = vmatprep.subr.mxu0 0.0
        %1810 = vmatpush1.msra.mxu0 0.0
        %1811 = vmatprep.subr.mxu0 0.0
        %1812 = vmatpush1.msra.mxu0 0.0
        %1813 = vmatprep.subr.mxu0 0.0
        %1814 = vmatpush1.msra.mxu0 0.0
        %1815 = vmatprep.subr.mxu0 0.0
        %1816 = vmatpush1.msra.mxu0 0.0
        %1817 = vmatprep.subr.mxu0 0.0
        %1818 = vmatpush1.msra.mxu0 0.0
        %1819 = vmatprep.subr.mxu0 0.0
        %1820 = vmatpush1.msra.mxu0 0.0
        %1821 = vmatprep.subr.mxu0 0.0
        %1822 = vmatpush1.msra.mxu0 0.0
        %1823 = vmatprep.subr.mxu0 0.0
        %1824 = vmatpush1.msra.mxu0 0.0
        %1825 = vmatprep.subr.mxu0 0.0
        %1826 = vmatpush1.msra.mxu0 0.0
        %1827 = vmatprep.subr.mxu0 0.0
        %1828 = vmatpush1.msra.mxu0 0.0
        %1829 = vmatprep.subr.mxu0 0.0
        %1830 = vmatpush1.msra.mxu0 0.0
        %1831 = vmatprep.subr.mxu0 0.0
        %1832 = vmatpush1.msra.mxu0 0.0
        %1833 = vmatprep.subr.mxu0 0.0
        %1834 = vmatpush1.msra.mxu0 0.0
        %1835 = vmatprep.subr.mxu0 0.0
        %1836 = vmatpush1.msra.mxu0 0.0
        %1837 = vmatprep.subr.mxu0 0.0
        %1838 = vmatpush1.msra.mxu0 0.0
        %1839 = vmatprep.subr.mxu0 0.0
        %1840 = vmatpush1.msra.mxu0 0.0
        %1841 = vmatprep.subr.mxu0 0.0
        %1842 = vmatpush1.msra.mxu0 0.0
        %1843 = vmatprep.subr.mxu0 0.0
        %1844 = vmatpush1.msra.mxu0 0.0
        %1845 = vmatprep.mubr.f32.mxu0 0.0
        %1846 = vmatmul.mubr.f32.gmra.mrb[0].mxu0 %v1779
        %v1847 = vpop.f32.mrb[0].mxu0
        %v1848 = vadd.f32 %v1776, %v1847
        %v1849 = vpop.f32.mrb[0].mxu0
        %1850 = vdwg.mxu0
        %v1851 = vxor.u32 %v1848, 2147483648
        %v1852 = vmul.f32 %v1851, 1.442695
        %v1853 = vpow.pop %v1852
        %v1854 = vadd.f32 %v1853, 1.0
        %v1855 = vrcp.pop %v1854
        %v1856 = vmul.f32 1.0, %v1855
        %v1857 = vmul.f32 %v1848, %v1856
        %1859 = vrot.lane.b32.xlu0 %v1848, 64
        %v1860 = vpop.permute.xlu0 %1859
        %v1862 = vmul.f32 %v1857, %v1860
        %v1863 = vld [vmem:[%s807] sm:$0xff]
        %v1864 = vld [vmem:[%s807 + $0x8] sm:$0xff]
        %v1865 = vld [vmem:[%s807 + $0x10] sm:$0xff]
        %v1866 = vld [vmem:[%s807 + $0x18] sm:$0xff]
        %v1867 = vld [vmem:[%s807 + $0x20] sm:$0xff]
        %v1868 = vld [vmem:[%s807 + $0x28] sm:$0xff]
        %v1869 = vld [vmem:[%s807 + $0x30] sm:$0xff]
        %v1870 = vld [vmem:[%s807 + $0x38] sm:$0xff]
        %v1871 = vld [vmem:[%s810] sm:$0x1]
        %v1873 = vlaneseq
        %v1874 = vshrl.u32 %v1873, 7
        %v1875 = vsub.s32 0, %v1874
        %v1876 = vrot.slane %v1871, %v1875
        %vm1878 = vcmask 523264
        %v1880 = vsel %vm1878, %v1862, 0
        %1882 = vmatprep.subr.mxu0 0.0
        %1883 = vmatpush1.msra.mxu0 %v1863
        %1884 = vmatprep.subr.mxu0 0.0
        %1885 = vmatpush1.msra.mxu0 %v1864
        %1886 = vmatprep.subr.mxu0 0.0
        %1887 = vmatpush1.msra.mxu0 %v1865
        %1888 = vmatprep.subr.mxu0 0.0
        %1889 = vmatpush1.msra.mxu0 %v1866
        %1890 = vmatprep.subr.mxu0 0.0
        %1891 = vmatpush1.msra.mxu0 %v1867
        %1892 = vmatprep.subr.mxu0 0.0
        %1893 = vmatpush1.msra.mxu0 %v1868
        %1894 = vmatprep.subr.mxu0 0.0
        %1895 = vmatpush1.msra.mxu0 %v1869
        %1896 = vmatprep.subr.mxu0 0.0
        %1897 = vmatpush1.msra.mxu0 %v1870
        %1898 = vmatprep.subr.mxu0 0.0
        %1899 = vmatpush1.msra.mxu0 0.0
        %1900 = vmatprep.subr.mxu0 0.0
        %1901 = vmatpush1.msra.mxu0 0.0
        %1902 = vmatprep.subr.mxu0 0.0
        %1903 = vmatpush1.msra.mxu0 0.0
        %1904 = vmatprep.subr.mxu0 0.0
        %1905 = vmatpush1.msra.mxu0 0.0
        %1906 = vmatprep.subr.mxu0 0.0
        %1907 = vmatpush1.msra.mxu0 0.0
        %1908 = vmatprep.subr.mxu0 0.0
        %1909 = vmatpush1.msra.mxu0 0.0
        %1910 = vmatprep.subr.mxu0 0.0
        %1911 = vmatpush1.msra.mxu0 0.0
        %1912 = vmatprep.subr.mxu0 0.0
        %1913 = vmatpush1.msra.mxu0 0.0
        %1914 = vmatprep.subr.mxu0 0.0
        %1915 = vmatpush1.msra.mxu0 0.0
        %1916 = vmatprep.subr.mxu0 0.0
        %1917 = vmatpush1.msra.mxu0 0.0
        %1918 = vmatprep.subr.mxu0 0.0
        %1919 = vmatpush1.msra.mxu0 0.0
        %1920 = vmatprep.subr.mxu0 0.0
        %1921 = vmatpush1.msra.mxu0 0.0
        %1922 = vmatprep.subr.mxu0 0.0
        %1923 = vmatpush1.msra.mxu0 0.0
        %1924 = vmatprep.subr.mxu0 0.0
        %1925 = vmatpush1.msra.mxu0 0.0
        %1926 = vmatprep.subr.mxu0 0.0
        %1927 = vmatpush1.msra.mxu0 0.0
        %1928 = vmatprep.subr.mxu0 0.0
        %1929 = vmatpush1.msra.mxu0 0.0
        %1930 = vmatprep.subr.mxu0 0.0
        %1931 = vmatpush1.msra.mxu0 0.0
        %1932 = vmatprep.subr.mxu0 0.0
        %1933 = vmatpush1.msra.mxu0 0.0
        %1934 = vmatprep.subr.mxu0 0.0
        %1935 = vmatpush1.msra.mxu0 0.0
        %1936 = vmatprep.subr.mxu0 0.0
        %1937 = vmatpush1.msra.mxu0 0.0
        %1938 = vmatprep.subr.mxu0 0.0
        %1939 = vmatpush1.msra.mxu0 0.0
        %1940 = vmatprep.subr.mxu0 0.0
        %1941 = vmatpush1.msra.mxu0 0.0
        %1942 = vmatprep.subr.mxu0 0.0
        %1943 = vmatpush1.msra.mxu0 0.0
        %1944 = vmatprep.subr.mxu0 0.0
        %1945 = vmatpush1.msra.mxu0 0.0
        %1946 = vmatprep.mubr.f32.mxu0 0.0
        %1947 = vmatmul.mubr.f32.gmra.mrb[0].mxu0 %v1880
        %v1948 = vpop.f32.mrb[0].mxu0
        %v1949 = vadd.f32 %v1876, %v1948
        %v1950 = vpop.f32.mrb[0].mxu0
        %1951 = vdwg.mxu0
        %v1952 = vadd.f32 %v1737, %v1949
        %1953 = vst.msk [vmem:[#allocation2] sm:$0xff] %vm829, %v1952
        %p1954 = scmp.eq.s32.totalorder %s38, 1
        // Predicated region
        $region109: #{tpu_custom_call.1} parent=87 // pred_check
          %p1955 = pneg %p1954
        $region110: #{tpu_custom_call.1} parent=87 // pred_check_branch
          %1957 = sbr.rel (%p1955) target = $region112
        $region111: #{tpu_custom_call.1} parent=87 // pred_region
          %v1958 = vld [vmem:[%s15] sm:$0x1]
          %v1959 = vld [vmem:[%s16] sm:$0x1]
          %v1960 = vsel %vm829, %v1952, 0.0
          %1961 = vadd.xlane.f32.xlu0 %v1960
          %v1962 = vpop.xlane.xlu0 %1961
          %v1963 = vmul.f32 %v1962, %v833
          %v1964 = vsub.f32 %v1952, %v1963
          %v1965 = vmul.f32 %v1964, %v1964
          %v1966 = vsel %vm829, %v1965, 0.0
          %1967 = vadd.xlane.f32.xlu0 %v1966
          %v1968 = vpop.xlane.xlu0 %1967
          %v1969 = vmul.f32 %v1968, %v833
          %v1970 = vadd.f32 %v1969, 1e-05
          %v1971 = vrsqrt.pop %v1970
          %v1972 = vmul.f32 %v1964, %v1971
          %v1974 = vlaneseq
          %v1975 = vshrl.u32 %v1974, 7
          %v1976 = vsub.s32 0, %v1975
          %v1977 = vrot.slane %v1958, %v1976
          %v1979 = vmul.f32 %v1972, %v1977
          %v1981 = vlaneseq
          %v1982 = vshrl.u32 %v1981, 7
          %v1983 = vsub.s32 0, %v1982
          %v1984 = vrot.slane %v1959, %v1983
          %v1986 = vadd.f32 %v1979, %v1984
          %1987 = vst.msk [vmem:[%s769] sm:$0xff] %vm829, %v1986
        $region112: #{tpu_custom_call.1} parent=87 // pred_fallthru
          _
        %s1988 = sand.u32 %s475, 1
        %s1989 = scalar_lea.sflag [#allocation5], %s1988
        %s1990 = sand.u32 %s475, 1
        %s1991 = smul.addr %s1990, 8
        %s1992 = scalar_lea.vmem [#allocation10], %s1991
        // Predicated region
        $region113: #{tpu_custom_call.1} parent=87 // pred_check
          %p1993 = pneg %p485
        $region114: #{tpu_custom_call.1} parent=87 // pred_check_branch
          %1995 = sbr.rel (%p1993) target = $region116
        $region115: #{tpu_custom_call.1} parent=87 // pred_region
          %s1997 = ssub.s32 128, 128
          %1998 = vsyncadd %s1989, %s1997
          %s1999 = smul.addr %s37, 128
          %s2000 = scalar_lea.hbm %s17, %s1999
          %s2002 = sshll.u32 %s1992, 4
          %s2003 = int_to_ptr.vmem [resolvable:$true] %s2002
          %2005 = dma.vmem_to_hbm [thread:$0]  %s2003, 128, %s2000, %s1989
        $region116: #{tpu_custom_call.1} parent=87 // pred_fallthru
          _
      $region88: #{tpu_custom_call.1} parent=5 // pred_fallthru
        _
      %p2006 = scmp.le.s32.totalorder 2, %s28
      // Predicated region
      $region117: #{tpu_custom_call.1} parent=5 // pred_check
        %p2007 = pneg %p2006
      $region118: #{tpu_custom_call.1} parent=5 // pred_check_branch
        %2009 = sbr.rel (%p2007) target = $region120
      $region119: #{tpu_custom_call.1} parent=5 // pred_region
        %s2010 = ssub.s32 %s28, 2
        // Predicated region
        $region121: #{tpu_custom_call.1} parent=119 // pred_check
          %p2011 = pneg %p491
        $region122: #{tpu_custom_call.1} parent=119 // pred_check_branch
          %2013 = sbr.rel (%p2011) target = $region124
        $region123: #{tpu_custom_call.1} parent=119 // pred_region
          %s2014 = sand.u32 %s476, 1
          %s2015 = scalar_lea.sflag [#allocation5], %s2014
          %s2016 = sand.u32 %s476, 1
          %s2017 = smul.addr %s2016, 8
          %s2018 = scalar_lea.vmem [#allocation10], %s2017
          %2019 = dma.done %s2015, 128
        $region124: #{tpu_custom_call.1} parent=119 // pred_fallthru
          _
      $region120: #{tpu_custom_call.1} parent=5 // pred_fallthru
        _
    $region6: #{tpu_custom_call.1} parent=1 // loop_footer
      %s32 = sadd.s32 1, %s28
    $region7: #{tpu_custom_call.1} parent=1 // loop_footer_branch
      %27 = sbr.rel target = $region3
    $region8: #{tpu_custom_call.1} parent=1 // loop_exit
      _
    %2020 = vsyncpa [#allocation4], 1
    %s2021 = scalar_lea.sflag [#allocation4], 1
    %2022 = vsyncpa %s2021, 1
    %2023 = vsyncpa [#allocation7], 1
    %2024 = vsyncpa [#allocation5], 1
    %s2025 = scalar_lea.sflag [#allocation5], 1
    %2026 = vsyncpa %s2025, 1

</llo_original>
